<compile_context>
chip_gen: v6e
topology: v6e:2x2x1
jax: 0.10.0
libtpu: 0.0.40
codegen_flags: <defaults>
</compile_context>

<pallas_src>
import functools

import jax
import jax.numpy as jnp
from jax.experimental import pallas as pl
from jax.experimental.pallas import tpu as pltpu


def _round_up(x, m):
    return (x + m - 1) // m * m


def _flash_sdpa_kernel(*refs, inv_temperature, has_mask, mask_pad_keys,
                       kv_valid_len, block_k):
    # refs (with mask):    q, k, v, mask, o, q_scr, m_scr, l_scr, acc_scr
    # refs (without mask): q, k, v,       o, q_scr, m_scr, l_scr, acc_scr
    if has_mask:
        q_ref, k_ref, v_ref, mask_ref, o_ref, q_scr, m_scr, l_scr, acc_scr = refs
    else:
        q_ref, k_ref, v_ref, o_ref, q_scr, m_scr, l_scr, acc_scr = refs
        mask_ref = None

    kv_idx = pl.program_id(2)

    @pl.when(kv_idx == 0)
    def _init():
        m_scr[...] = jnp.full(m_scr.shape, -jnp.inf, jnp.float32)
        l_scr[...] = jnp.zeros(l_scr.shape, jnp.float32)
        acc_scr[...] = jnp.zeros(acc_scr.shape, jnp.float32)
        # Cache the 1/temperature-scaled Q tile once; reused across all kv steps
        # (the q block index does not depend on kv, so the tile is constant).
        q_scr[...] = (q_ref[...].astype(jnp.float32) *
                      jnp.float32(inv_temperature)).astype(q_scr.dtype)

    # attMatrix = q @ k^T -- contract the last dims of both operands (no transpose).
    # Operands are bf16 (cast in the wrapper), accumulation is f32 on the MXU.
    s = jax.lax.dot_general(
        q_scr[...], k_ref[...],
        dimension_numbers=(((1,), (1,)), ((), ())),
        preferred_element_type=jnp.float32)

    if has_mask:
        # mask_ref is (tq, tk) dense or (1, tk) key-padding; broadcast either way.
        s = jnp.where(mask_ref[...] != 0, jnp.float32(-100000.0), s)
    elif mask_pad_keys:
        # No user mask, but keys were padded: mask the padded key positions in-kernel
        # (no HBM mask stream needed).
        key_pos = kv_idx * block_k + jax.lax.broadcasted_iota(jnp.int32, s.shape, 1)
        s = jnp.where(key_pos >= kv_valid_len, jnp.float32(-100000.0), s)

    # Online-softmax update (softmax over the key axis, dim=2 in the original module).
    m_prev = m_scr[...]
    m_new = jnp.maximum(m_prev, jnp.max(s, axis=-1, keepdims=True))
    alpha = jnp.exp(m_prev - m_new)
    p = jnp.exp(s - m_new)

    l_scr[...] = alpha * l_scr[...] + jnp.sum(p, axis=-1, keepdims=True)
    acc_scr[...] = alpha * acc_scr[...] + jnp.dot(
        p.astype(v_ref.dtype), v_ref[...], preferred_element_type=jnp.float32)
    m_scr[...] = m_new

    @pl.when(kv_idx == pl.num_programs(2) - 1)
    def _finalize():
        inv_l = pl.reciprocal(l_scr[...], approx=True)
        # Dropout is identity in eval mode (nn.Dropout.eval()).
        o_ref[...] = (acc_scr[...] * inv_l).astype(o_ref.dtype)


def scaled_dot_product_attention(q, k, v, mask=None, temperature=1.0,
                                 *, block_q=256, block_k=512):
    """q: (B, Lq, D), k: (B, Lk, D), v: (B, Lk, Dv).

    mask: None | (B, Lk) key-padding | (B, Lq, Lk) dense; nonzero = masked.
    """
    B, Lq, D = q.shape
    Bk, Lk, Dk = k.shape
    Bv, Lkv, Dv = v.shape
    assert Dk == D and Bk == B and Bv == B and Lkv == Lk

    out_dtype = q.dtype
    # Feed the MXU in bf16 (4-8x MXU throughput vs f32 and half the HBM traffic for
    # the K/V tiles that are re-streamed once per Q tile).
    compute_dtype = jnp.bfloat16 if q.dtype == jnp.float32 else q.dtype

    # Tile sizes: sublane-aligned tq, lane-aligned tk; clamp to the (rounded) extents.
    block_q = _round_up(max(block_q, 8), 8)
    block_k = _round_up(max(block_k, 128), 128)
    tq = min(block_q, _round_up(Lq, 8))
    tk = min(block_k, _round_up(Lk, 128))

    # Pad sequence lengths to tile multiples (padded keys get masked; padded query
    # rows are sliced off).  Pad Dv to a multiple of 128 so the output store is
    # lane-dense and the PV matmul fills the MXU N dimension.
    Lq_p = _round_up(Lq, tq)
    Lk_p = _round_up(Lk, tk)
    Dv_p = _round_up(Dv, 128)

    qc = q.astype(compute_dtype)
    kc = k.astype(compute_dtype)
    vc = v.astype(compute_dtype)
    if Lq_p != Lq:
        qc = jnp.pad(qc, ((0, 0), (0, Lq_p - Lq), (0, 0)))
    if Lk_p != Lk:
        kc = jnp.pad(kc, ((0, 0), (0, Lk_p - Lk), (0, 0)))
    if Lk_p != Lk or Dv_p != Dv:
        vc = jnp.pad(vc, ((0, 0), (0, Lk_p - Lk), (0, Dv_p - Dv)))

    has_mask = mask is not None
    mask_inputs = ()
    mask_specs = []
    if has_mask:
        if mask.ndim == 2:
            # (B, Lk) key-padding mask: stream only O(B*Lk) int8, broadcast in-kernel.
            m8 = mask.astype(jnp.int8).reshape(B, 1, Lk)
            if Lk_p != Lk:
                m8 = jnp.pad(m8, ((0, 0), (0, 0), (0, Lk_p - Lk)), constant_values=1)
            mask_specs = [pl.BlockSpec((pl.Squeezed(), 1, tk),
                                       lambda b, qi, kv: (b, 0, kv))]
        else:
            # Dense (B, Lq, Lk) fallback, streamed as int8 (4x less HBM than int32).
            assert mask.shape == (B, Lq, Lk)
            m8 = mask.astype(jnp.int8)
            if Lq_p != Lq or Lk_p != Lk:
                m8 = jnp.pad(m8, ((0, 0), (0, Lq_p - Lq), (0, Lk_p - Lk)),
                             constant_values=1)
            mask_specs = [pl.BlockSpec((pl.Squeezed(), tq, tk),
                                       lambda b, qi, kv: (b, qi, kv))]
        mask_inputs = (m8,)

    kernel = functools.partial(
        _flash_sdpa_kernel,
        inv_temperature=1.0 / float(temperature),
        has_mask=has_mask,
        mask_pad_keys=(not has_mask) and (Lk_p != Lk),
        kv_valid_len=Lk,
        block_k=tk)

    # Note (v7x): keep B * (Lq_p // tq) >= 2 so both TensorCores get work.
    grid = (B, Lq_p // tq, Lk_p // tk)

    in_specs = [
        pl.BlockSpec((pl.Squeezed(), tq, D), lambda b, qi, kv: (b, qi, 0)),
        pl.BlockSpec((pl.Squeezed(), tk, D), lambda b, qi, kv: (b, kv, 0)),
        pl.BlockSpec((pl.Squeezed(), tk, Dv_p), lambda b, qi, kv: (b, kv, 0)),
    ] + mask_specs
    out_specs = pl.BlockSpec((pl.Squeezed(), tq, Dv_p), lambda b, qi, kv: (b, qi, 0))

    scratch_shapes = [
        pltpu.VMEM((tq, D), compute_dtype),    # 1/temperature-scaled Q cache
        pltpu.VMEM((tq, 1), jnp.float32),      # running max m
        pltpu.VMEM((tq, 1), jnp.float32),      # running sum l
        pltpu.VMEM((tq, Dv_p), jnp.float32),   # running accumulator
    ]

    # Honest cost estimate: K/V (and any mask) are re-streamed once per Q tile.
    q_tiles = Lq_p // tq
    itemsize = jnp.dtype(compute_dtype).itemsize
    flops = 2 * B * Lq_p * Lk_p * D + 2 * B * Lq_p * Lk_p * Dv_p
    if has_mask and mask.ndim == 3:
        mask_bytes = B * Lq_p * Lk_p
    elif has_mask:
        mask_bytes = B * q_tiles * Lk_p
    else:
        mask_bytes = 0
    bytes_accessed = (B * Lq_p * D * itemsize
                      + q_tiles * B * Lk_p * D * itemsize
                      + q_tiles * B * Lk_p * Dv_p * itemsize
                      + mask_bytes
                      + B * Lq_p * Dv_p * jnp.dtype(out_dtype).itemsize)
    cost = pl.CostEstimate(flops=flops, transcendentals=B * Lq_p * Lk_p,
                           bytes_accessed=bytes_accessed)

    out = pl.pallas_call(
        kernel,
        out_shape=jax.ShapeDtypeStruct((B, Lq_p, Dv_p), out_dtype),
        grid_spec=pltpu.PrefetchScalarGridSpec(
            num_scalar_prefetch=0,
            grid=grid,
            in_specs=in_specs,
            out_specs=out_specs,
            scratch_shapes=scratch_shapes,
        ),
        compiler_params=pltpu.CompilerParams(
            dimension_semantics=("parallel", "parallel", "arbitrary"),
            # Headroom under v7x's 64 MiB physical / 32 MiB default scoped VMEM;
            # plenty for v5e/v6e.  Double-buffered working set at 256x512 bf16 tiles
            # is only a few MiB.
            vmem_limit_bytes=32 * 1024 * 1024,
        ),
        cost_estimate=cost,
    )(qc, kc, vc, *mask_inputs)

    if Lq_p != Lq or Dv_p != Dv:
        out = out[:, :Lq, :Dv]
    return out


def reference_sdpa(q, k, v, mask, temperature):
    s = jnp.einsum("bqd,bkd->bqk", q, k) / temperature
    if mask is not None:
        m = mask if mask.ndim == 3 else mask[:, None, :]
        s = jnp.where(m != 0, -100000.0, s)
    attn = jax.nn.softmax(s, axis=2)
    return jnp.einsum("bqk,bkd->bqd", attn, v)


if __name__ == "__main__":
    # Non-multiple lengths on purpose: exercises pad+mask (200 -> 256, 336 -> 384),
    # the padded lane-dense Dv (64 -> 128) and multi-step online softmax.
    B, Lq, Lk, D, Dv = 2, 200, 336, 64, 64
    temperature = float(D) ** 0.5  # sqrt(d_k) = 8.0

    key = jax.random.PRNGKey(0)
    kq, kk, kvk, km = jax.random.split(key, 4)
    q = jax.random.normal(kq, (B, Lq, D), dtype=jnp.float32)
    k = jax.random.normal(kk, (B, Lk, D), dtype=jnp.float32)
    v = jax.random.normal(kvk, (B, Lk, Dv), dtype=jnp.float32)

    # 1) Dense boolean mask (1 = masked), streamed as int8.
    mask = (jax.random.uniform(km, (B, Lq, Lk)) < 0.2).astype(jnp.int8)
    out = scaled_dot_product_attention(q, k, v, mask, temperature,
                                       block_q=128, block_k=128)
    out = jax.block_until_ready(out)
    ref = reference_sdpa(q, k, v, mask, temperature)
    assert out.shape == (B, Lq, Dv)
    err = float(jnp.max(jnp.abs(out - ref)))
    assert jnp.allclose(out, ref, atol=2e-2, rtol=2e-2), \
        f"dense-mask mismatch vs reference, max abs err {err}"

    # 2) mask=None path (no mask HBM stream; padded keys masked in-kernel via iota).
    out2 = jax.block_until_ready(
        scaled_dot_product_attention(q, k, v, None, temperature,
                                     block_q=128, block_k=128))
    ref2 = reference_sdpa(q, k, v, None, temperature)
    err2 = float(jnp.max(jnp.abs(out2 - ref2)))
    assert jnp.allclose(out2, ref2, atol=2e-2, rtol=2e-2), \
        f"no-mask mismatch vs reference, max abs err {err2}"

    # 3) Factored (B, Lk) key-padding mask path (O(B*Lk) mask traffic).
    valid_len = jnp.array([300, 250], dtype=jnp.int32)
    kpad = (jnp.arange(Lk)[None, :] >= valid_len[:, None]).astype(jnp.int8)
    out3 = jax.block_until_ready(
        scaled_dot_product_attention(q, k, v, kpad, temperature,
                                     block_q=128, block_k=128))
    ref3 = reference_sdpa(q, k, v, kpad, temperature)
    err3 = float(jnp.max(jnp.abs(out3 - ref3)))
    assert jnp.allclose(out3, ref3, atol=2e-2, rtol=2e-2), \
        f"key-pad-mask mismatch vs reference, max abs err {err3}"

    print("KERNEL_OK")
</pallas_src>

<mosaic_0001>
module attributes {stable_mosaic.version = 11 : i64} {
  func.func @_flash_sdpa_kernel(%arg0: i32, %arg1: i32, %arg2: i32, %arg3: memref<1x128x64xbf16, #tpu.memory_space<vmem>>, %arg4: memref<1x128x64xbf16, #tpu.memory_space<vmem>>, %arg5: memref<1x128x128xbf16, #tpu.memory_space<vmem>>, %arg6: memref<1x128x128xi8, #tpu.memory_space<vmem>>, %arg7: memref<1x128x128xf32, #tpu.memory_space<vmem>>, %arg8: memref<128x64xbf16, #tpu.memory_space<vmem>>, %arg9: memref<128x1xf32, #tpu.memory_space<vmem>>, %arg10: memref<128x1xf32, #tpu.memory_space<vmem>>, %arg11: memref<128x128xf32, #tpu.memory_space<vmem>>) attributes {dimension_semantics = [#tpu.dimension_semantics<parallel>, #tpu.dimension_semantics<parallel>, #tpu.dimension_semantics<arbitrary>], iteration_bounds = array<i64: 2, 2, 3>, scalar_prefetch = 0 : i64, scratch_operands = 4 : i64, tpu.core_type = #tpu.core_type<tc>, window_params = [{transform_indices = @transform_0, window_bounds = array<i64: 1, 128, 64>}, {transform_indices = @transform_1, window_bounds = array<i64: 1, 128, 64>}, {transform_indices = @transform_2, window_bounds = array<i64: 1, 128, 128>}, {transform_indices = @transform_3, window_bounds = array<i64: 1, 128, 128>}, {transform_indices = @transform_4, window_bounds = array<i64: 1, 128, 128>}]} {
    %c0_i32 = arith.constant 0 : i32
    %0 = arith.cmpi eq, %arg2, %c0_i32 : i32
    %1 = arith.extui %0 : i1 to i32
    %c0_i32_0 = arith.constant 0 : i32
    %2 = arith.cmpi ne, %1, %c0_i32_0 : i32
    scf.if %2 {
      %cst_28 = arith.constant 0xFF800000 : f32
      %41 = vector.broadcast %cst_28 : f32 to vector<128x1xf32>
      %c0_29 = arith.constant 0 : index
      %c0_30 = arith.constant 0 : index
      %42 = vector.load %arg9[%c0_29, %c0_30] : memref<128x1xf32, #tpu.memory_space<vmem>>, vector<128x1xf32>
      tpu.vector_store %arg9[%c0_29, %c0_30], %41 {strides = array<i32>} : memref<128x1xf32, #tpu.memory_space<vmem>>, vector<128x1xf32>,
      %cst_31 = arith.constant 0.000000e+00 : f32
      %43 = vector.broadcast %cst_31 : f32 to vector<128x1xf32>
      %c0_32 = arith.constant 0 : index
      %c0_33 = arith.constant 0 : index
      %44 = vector.load %arg10[%c0_32, %c0_33] : memref<128x1xf32, #tpu.memory_space<vmem>>, vector<128x1xf32>
      tpu.vector_store %arg10[%c0_32, %c0_33], %43 {strides = array<i32>} : memref<128x1xf32, #tpu.memory_space<vmem>>, vector<128x1xf32>,
      %cst_34 = arith.constant 0.000000e+00 : f32
      %45 = vector.broadcast %cst_34 : f32 to vector<128x128xf32>
      %c0_35 = arith.constant 0 : index
      %c0_36 = arith.constant 0 : index
      %46 = vector.load %arg11[%c0_35, %c0_36] : memref<128x128xf32, #tpu.memory_space<vmem>>, vector<128x128xf32>
      tpu.vector_store %arg11[%c0_35, %c0_36], %45 {strides = array<i32>} : memref<128x128xf32, #tpu.memory_space<vmem>>, vector<128x128xf32>,
      %c0_37 = arith.constant 0 : index
      %c0_38 = arith.constant 0 : index
      %c0_39 = arith.constant 0 : index
      %47 = vector.load %arg3[%c0_37, %c0_38, %c0_39] : memref<1x128x64xbf16, #tpu.memory_space<vmem>>, vector<1x128x64xbf16>
      %48 = vector.shape_cast %47 : vector<1x128x64xbf16> to vector<128x64xbf16>
      %49 = arith.extf %48 : vector<128x64xbf16> to vector<128x64xf32>
      %cst_40 = arith.constant 1.250000e-01 : f32
      %50 = vector.broadcast %cst_40 : f32 to vector<128x64xf32>
      %51 = arith.mulf %49, %50 : vector<128x64xf32>
      %52 = arith.truncf %51 : vector<128x64xf32> to vector<128x64xbf16>
      %c0_41 = arith.constant 0 : index
      %c0_42 = arith.constant 0 : index
      %53 = vector.load %arg8[%c0_41, %c0_42] : memref<128x64xbf16, #tpu.memory_space<vmem>>, vector<128x64xbf16>
      tpu.vector_store %arg8[%c0_41, %c0_42], %52 {strides = array<i32>} : memref<128x64xbf16, #tpu.memory_space<vmem>>, vector<128x64xbf16>,
    } else {
    }
    %c0 = arith.constant 0 : index
    %c0_1 = arith.constant 0 : index
    %3 = vector.load %arg8[%c0, %c0_1] : memref<128x64xbf16, #tpu.memory_space<vmem>>, vector<128x64xbf16>
    %c0_2 = arith.constant 0 : index
    %c0_3 = arith.constant 0 : index
    %c0_4 = arith.constant 0 : index
    %4 = vector.load %arg4[%c0_2, %c0_3, %c0_4] : memref<1x128x64xbf16, #tpu.memory_space<vmem>>, vector<1x128x64xbf16>
    %5 = vector.shape_cast %4 : vector<1x128x64xbf16> to vector<128x64xbf16>
    %cst = arith.constant dense<0.000000e+00> : vector<128x128xf32>
    %6 = tpu.matmul %3, %5, %cst {dimension_numbers = #tpu.dot_dimension_numbers<[1], [1], [0], [0], [0, 0, 1, 0], [], []>} : vector<128x64xbf16>, vector<128x64xbf16>, vector<128x128xf32> -> vector<128x128xf32>
    %c0_5 = arith.constant 0 : index
    %c0_6 = arith.constant 0 : index
    %c0_7 = arith.constant 0 : index
    %7 = vector.load %arg6[%c0_5, %c0_6, %c0_7] : memref<1x128x128xi8, #tpu.memory_space<vmem>>, vector<1x128x128xi8>
    %8 = vector.shape_cast %7 : vector<1x128x128xi8> to vector<128x128xi8>
    %c0_i8 = arith.constant 0 : i8
    %9 = vector.broadcast %c0_i8 : i8 to vector<128x128xi8>
    %10 = arith.cmpi ne, %8, %9 : vector<128x128xi8>
    %cst_8 = arith.constant -1.000000e+05 : f32
    %11 = vector.broadcast %cst_8 : f32 to vector<128x128xf32>
    %12 = arith.select %10, %11, %6 : vector<128x128xi1>, vector<128x128xf32>
    %c0_9 = arith.constant 0 : index
    %c0_10 = arith.constant 0 : index
    %13 = vector.load %arg9[%c0_9, %c0_10] : memref<128x1xf32, #tpu.memory_space<vmem>>, vector<128x1xf32>
    %cst_11 = arith.constant dense<0xFF800000> : vector<128xf32>
    %14 = vector.multi_reduction <maximumf>, %12, %cst_11 [1] : vector<128x128xf32> to vector<128xf32>
    %15 = vector.shape_cast %14 : vector<128xf32> to vector<128x1xf32>
    %16 = arith.maximumf %13, %15 : vector<128x1xf32>
    %17 = arith.subf %13, %16 : vector<128x1xf32>
    %18 = math.exp %17 : vector<128x1xf32>
    %19 = vector.broadcast %16 : vector<128x1xf32> to vector<128x128xf32>
    %20 = arith.subf %12, %19 : vector<128x128xf32>
    %21 = math.exp %20 : vector<128x128xf32>
    %c0_12 = arith.constant 0 : index
    %c0_13 = arith.constant 0 : index
    %22 = vector.load %arg10[%c0_12, %c0_13] : memref<128x1xf32, #tpu.memory_space<vmem>>, vector<128x1xf32>
    %23 = arith.mulf %18, %22 : vector<128x1xf32>
    %cst_14 = arith.constant dense<0.000000e+00> : vector<128xf32>
    %24 = vector.multi_reduction <add>, %21, %cst_14 [1] : vector<128x128xf32> to vector<128xf32>
    %25 = vector.shape_cast %24 : vector<128xf32> to vector<128x1xf32>
    %26 = arith.addf %23, %25 : vector<128x1xf32>
    %c0_15 = arith.constant 0 : index
    %c0_16 = arith.constant 0 : index
    %27 = vector.load %arg10[%c0_15, %c0_16] : memref<128x1xf32, #tpu.memory_space<vmem>>, vector<128x1xf32>
    tpu.vector_store %arg10[%c0_15, %c0_16], %26 {strides = array<i32>} : memref<128x1xf32, #tpu.memory_space<vmem>>, vector<128x1xf32>,
    %c0_17 = arith.constant 0 : index
    %c0_18 = arith.constant 0 : index
    %28 = vector.load %arg11[%c0_17, %c0_18] : memref<128x128xf32, #tpu.memory_space<vmem>>, vector<128x128xf32>
    %29 = vector.broadcast %18 : vector<128x1xf32> to vector<128x128xf32>
    %30 = arith.mulf %29, %28 : vector<128x128xf32>
    %31 = arith.truncf %21 : vector<128x128xf32> to vector<128x128xbf16>
    %c0_19 = arith.constant 0 : index
    %c0_20 = arith.constant 0 : index
    %c0_21 = arith.constant 0 : index
    %32 = vector.load %arg5[%c0_19, %c0_20, %c0_21] : memref<1x128x128xbf16, #tpu.memory_space<vmem>>, vector<1x128x128xbf16>
    %33 = vector.shape_cast %32 : vector<1x128x128xbf16> to vector<128x128xbf16>
    %cst_22 = arith.constant dense<0.000000e+00> : vector<128x128xf32>
    %34 = tpu.matmul %31, %33, %cst_22 {dimension_numbers = #tpu.dot_dimension_numbers<[1], [0], [0], [1], [0, 0, 1, 1], [], []>} : vector<128x128xbf16>, vector<128x128xbf16>, vector<128x128xf32> -> vector<128x128xf32>
    %35 = arith.addf %30, %34 : vector<128x128xf32>
    %c0_23 = arith.constant 0 : index
    %c0_24 = arith.constant 0 : index
    %36 = vector.load %arg11[%c0_23, %c0_24] : memref<128x128xf32, #tpu.memory_space<vmem>>, vector<128x128xf32>
    tpu.vector_store %arg11[%c0_23, %c0_24], %35 {strides = array<i32>} : memref<128x128xf32, #tpu.memory_space<vmem>>, vector<128x128xf32>,
    %c0_25 = arith.constant 0 : index
    %c0_26 = arith.constant 0 : index
    %37 = vector.load %arg9[%c0_25, %c0_26] : memref<128x1xf32, #tpu.memory_space<vmem>>, vector<128x1xf32>
    tpu.vector_store %arg9[%c0_25, %c0_26], %16 {strides = array<i32>} : memref<128x1xf32, #tpu.memory_space<vmem>>, vector<128x1xf32>,
    %c2_i32 = arith.constant 2 : i32
    %38 = arith.cmpi eq, %arg2, %c2_i32 : i32
    %39 = arith.extui %38 : i1 to i32
    %c0_i32_27 = arith.constant 0 : i32
    %40 = arith.cmpi ne, %39, %c0_i32_27 : i32
    scf.if %40 {
      %c0_28 = arith.constant 0 : index
      %c0_29 = arith.constant 0 : index
      %41 = vector.load %arg10[%c0_28, %c0_29] : memref<128x1xf32, #tpu.memory_space<vmem>>, vector<128x1xf32>
      %42 = tpu.reciprocal %41 {approx = true} : vector<128x1xf32> -> vector<128x1xf32>
      %c0_30 = arith.constant 0 : index
      %c0_31 = arith.constant 0 : index
      %43 = vector.load %arg11[%c0_30, %c0_31] : memref<128x128xf32, #tpu.memory_space<vmem>>, vector<128x128xf32>
      %44 = vector.broadcast %42 : vector<128x1xf32> to vector<128x128xf32>
      %45 = arith.mulf %43, %44 : vector<128x128xf32>
      %c0_32 = arith.constant 0 : index
      %c0_33 = arith.constant 0 : index
      %c0_34 = arith.constant 0 : index
      %46 = vector.load %arg7[%c0_32, %c0_33, %c0_34] : memref<1x128x128xf32, #tpu.memory_space<vmem>>, vector<1x128x128xf32>
      %47 = vector.shape_cast %46 : vector<1x128x128xf32> to vector<128x128xf32>
      %48 = vector.shape_cast %45 : vector<128x128xf32> to vector<1x128x128xf32>
      tpu.vector_store %arg7[%c0_32, %c0_33, %c0_34], %48 {strides = array<i32>} : memref<1x128x128xf32, #tpu.memory_space<vmem>>, vector<1x128x128xf32>,
    } else {
    }
    return
  }
  func.func @transform_0(%arg0: i32, %arg1: i32, %arg2: i32) -> (i32, i32, i32) {
    %c0_i32 = arith.constant 0 : i32
    %c0_i32_0 = arith.constant 0 : i32
    return %arg0, %arg1, %c0_i32 : i32, i32, i32
  }
  func.func @transform_1(%arg0: i32, %arg1: i32, %arg2: i32) -> (i32, i32, i32) {
    %c0_i32 = arith.constant 0 : i32
    %c0_i32_0 = arith.constant 0 : i32
    return %arg0, %arg2, %c0_i32 : i32, i32, i32
  }
  func.func @transform_2(%arg0: i32, %arg1: i32, %arg2: i32) -> (i32, i32, i32) {
    %c0_i32 = arith.constant 0 : i32
    %c0_i32_0 = arith.constant 0 : i32
    return %arg0, %arg2, %c0_i32 : i32, i32, i32
  }
  func.func @transform_3(%arg0: i32, %arg1: i32, %arg2: i32) -> (i32, i32, i32) {
    %c0_i32 = arith.constant 0 : i32
    return %arg0, %arg1, %arg2 : i32, i32, i32
  }
  func.func @transform_4(%arg0: i32, %arg1: i32, %arg2: i32) -> (i32, i32, i32) {
    %c0_i32 = arith.constant 0 : i32
    %c0_i32_0 = arith.constant 0 : i32
    return %arg0, %arg1, %c0_i32 : i32, i32, i32
  }
}

</mosaic_0001>

<llo_original>
// kernel: tpu_custom_call.1
$region0: #{tpu_custom_call.1}
  #allocation0 [shape = 'u32[]', space=smem, size = 0x4, offset = 0x4, fixed_abs, tag = 'smem constant byte address 0x4 - core index']
  #allocation1 [shape = 'u32[144,128]{1,0:T(1,128)}', space=vmem, size = 0x12000, scoped, tag = 'internal scratch']
  #allocation2 [shape = 'bf16[128,64]{1,0:T(8,128)(2,1)}', space=vmem, size = 0x8000, scoped, tag = 'scratch operand']
  #allocation3 [shape = 'f32[128,1]{1,0:T(8,128)}', space=vmem, size = 0x10000, scoped, tag = 'scratch operand']
  #allocation4 [shape = 'f32[128,1]{1,0:T(8,128)}', space=vmem, size = 0x10000, scoped, tag = 'scratch operand']
  #allocation5 [shape = 'f32[128,128]{1,0:T(8,128)}', space=vmem, size = 0x10000, scoped, tag = 'scratch operand']
  %s0 = inlined_call_operand.vmem [shape: bf16[2,256,64], index: 0, kind: input, shape index: {}]
  %s1 = inlined_call_operand.vmem [shape: bf16[2,384,64], index: 1, kind: input, shape index: {}]
  %s2 = inlined_call_operand.vmem [shape: bf16[2,384,128], index: 2, kind: input, shape index: {}]
  %s3 = inlined_call_operand.vmem [shape: s8[2,256,384], index: 3, kind: input, shape index: {}]
  %s4 = inlined_call_operand.hbm [shape: f32[2,256,128], index: 4, kind: output, shape index: {}]
  %s5 = sld [smem:[#allocation0]]
  $region95: #{tpu_custom_call.1} parent=0
    _
  %s7 = ssub.s32 1, %s5
  %s8 = scalar_select 0, %s7, %s5
  $region1: #{tpu_custom_call.1} parent=0
    #allocation6 [shape = 'u8[32768]{0}', space=vmem, size = 0x8000, scoped, tag = 'input window, operand 3']
    #allocation7 [shape = 'u8[131072]{0}', space=vmem, size = 0x20000, scoped, tag = 'output window, operand 0']
    #allocation8 [shape = 's32[2]{0}', space=sflag, size = 0x8, scoped, tag = 'scoped memory for tpu_custom_call.1']
    %9 = vsyncpa [#allocation8], 0
    %s10 = scalar_lea.sflag [#allocation8], 1
    %11 = vsyncpa %s10, 0
    loop: start=0, step=1, limit=14
    $region2: #{tpu_custom_call.1} parent=1 // loop_pre_header
      _
    $region3: #{tpu_custom_call.1} parent=1 // loop_header
      %s13 = sphi 0, %s17
      %p14 = scmp.ge.s32.totalorder %s13, 14
      %s20 = sphi 0, %s39
      %s21 = sphi 0, %s35
      %s22 = sphi 0, %s31
      %s23 = sphi 0, %s20
      %s24 = sphi 0, %s21
      %s25 = sphi 0, %s22
      %s26 = sphi 0, %s23
      %s27 = sphi 0, %s24
      %s28 = sphi 0, %s25
      %s44 = sphi 0, %s46
      %s47 = sphi 0, %s44
      %s48 = sphi 0, %s47
      %s64 = sphi 0, %s48
      %s72 = sphi 0, %s74
      %s75 = sphi 0, %s72
      %s76 = sphi 0, %s75
      %s92 = sphi 0, %s76
      %s100 = sphi 0, %s102
      %s103 = sphi 0, %s100
      %s104 = sphi 0, %s103
      %s120 = sphi 0, %s104
      %s130 = sphi 0, %s132
      %s133 = sphi 0, %s130
      %s134 = sphi 0, %s133
      %s150 = sphi 0, %s134
      %s158 = sphi 0, %s160
      %s161 = sphi 0, %s158
      %s162 = sphi 0, %s161
      %s178 = sphi 0, %s162
    $region4: #{tpu_custom_call.1} parent=1 // loop_header_branch
      %16 = sbr.rel (%p14) target = $region8
    $region5: #{tpu_custom_call.1} parent=1 // loop_body
      %s18 = ssub.s32 %s13, 1
      %s19 = ssub.s32 %s13, 2
      %s29 = sadd.s32 1, %s22
      %p30 = scmp.ge.s32.totalorder %s29, 3
      %s31 = scalar_select %p30, 0, %s29
      %s32 = sadd.s32 1, %s21
      %s33 = scalar_select %p30, %s32, %s21
      %p34 = scmp.ge.s32.totalorder %s33, 2
      %s35 = scalar_select %p34, 0, %s33
      %s36 = sadd.s32 1, %s20
      %s37 = scalar_select %p34, %s36, %s20
      %p38 = scmp.ge.s32.totalorder %s37, 2
      %s39 = scalar_select %p38, 0, %s37
      %s40 = ssub.s32 %s20, %s39
      %s41 = ssub.s32 %s21, %s35
      %s42 = sor.u32 %s40, %s41
      %p43 = scmp.eq.s32.totalorder %s42, 0
      %s45 = sadd.s32 %s44, 1
      %s46 = scalar_select %p43, %s44, %s45
      %p49 = pneg %p43
      %p50 = scmp.eq.s32.totalorder %s13, 11
      %p51 = por %p49, %p50
      %p52 = scmp.ne.s32.totalorder %s44, %s47
      %p53 = scmp.eq.s32.totalorder %s13, 0
      %p54 = por %p52, %p53
      %p55 = scmp.ne.s32.totalorder %s44, %s47
      %p56 = scmp.eq.s32.totalorder %s18, 11
      %p57 = por %p55, %p56
      %p58 = scmp.ne.s32.totalorder %s47, %s48
      %p59 = scmp.eq.s32.totalorder %s18, 0
      %p60 = por %p58, %p59
      %p61 = scmp.ne.s32.totalorder %s47, %s48
      %p62 = scmp.eq.s32.totalorder %s19, 11
      %p63 = por %p61, %p62
      %p65 = scmp.ne.s32.totalorder %s48, %s64
      %p66 = scmp.eq.s32.totalorder %s19, 0
      %p67 = por %p65, %p66
      %s68 = ssub.s32 %s20, %s39
      %s69 = ssub.s32 %s22, %s31
      %s70 = sor.u32 %s68, %s69
      %p71 = scmp.eq.s32.totalorder %s70, 0
      %s73 = sadd.s32 %s72, 1
      %s74 = scalar_select %p71, %s72, %s73
      %p77 = pneg %p71
      %p78 = scmp.eq.s32.totalorder %s13, 11
      %p79 = por %p77, %p78
      %p80 = scmp.ne.s32.totalorder %s72, %s75
      %p81 = scmp.eq.s32.totalorder %s13, 0
      %p82 = por %p80, %p81
      %p83 = scmp.ne.s32.totalorder %s72, %s75
      %p84 = scmp.eq.s32.totalorder %s18, 11
      %p85 = por %p83, %p84
      %p86 = scmp.ne.s32.totalorder %s75, %s76
      %p87 = scmp.eq.s32.totalorder %s18, 0
      %p88 = por %p86, %p87
      %p89 = scmp.ne.s32.totalorder %s75, %s76
      %p90 = scmp.eq.s32.totalorder %s19, 11
      %p91 = por %p89, %p90
      %p93 = scmp.ne.s32.totalorder %s76, %s92
      %p94 = scmp.eq.s32.totalorder %s19, 0
      %p95 = por %p93, %p94
      %s96 = ssub.s32 %s20, %s39
      %s97 = ssub.s32 %s22, %s31
      %s98 = sor.u32 %s96, %s97
      %p99 = scmp.eq.s32.totalorder %s98, 0
      %s101 = sadd.s32 %s100, 1
      %s102 = scalar_select %p99, %s100, %s101
      %p105 = pneg %p99
      %p106 = scmp.eq.s32.totalorder %s13, 11
      %p107 = por %p105, %p106
      %p108 = scmp.ne.s32.totalorder %s100, %s103
      %p109 = scmp.eq.s32.totalorder %s13, 0
      %p110 = por %p108, %p109
      %p111 = scmp.ne.s32.totalorder %s100, %s103
      %p112 = scmp.eq.s32.totalorder %s18, 11
      %p113 = por %p111, %p112
      %p114 = scmp.ne.s32.totalorder %s103, %s104
      %p115 = scmp.eq.s32.totalorder %s18, 0
      %p116 = por %p114, %p115
      %p117 = scmp.ne.s32.totalorder %s103, %s104
      %p118 = scmp.eq.s32.totalorder %s19, 11
      %p119 = por %p117, %p118
      %p121 = scmp.ne.s32.totalorder %s104, %s120
      %p122 = scmp.eq.s32.totalorder %s19, 0
      %p123 = por %p121, %p122
      %s124 = ssub.s32 %s20, %s39
      %s125 = ssub.s32 %s21, %s35
      %s126 = sor.u32 %s124, %s125
      %s127 = ssub.s32 %s22, %s31
      %s128 = sor.u32 %s126, %s127
      %p129 = scmp.eq.s32.totalorder %s128, 0
      %s131 = sadd.s32 %s130, 1
      %s132 = scalar_select %p129, %s130, %s131
      %p135 = pneg %p129
      %p136 = scmp.eq.s32.totalorder %s13, 11
      %p137 = por %p135, %p136
      %p138 = scmp.ne.s32.totalorder %s130, %s133
      %p139 = scmp.eq.s32.totalorder %s13, 0
      %p140 = por %p138, %p139
      %p141 = scmp.ne.s32.totalorder %s130, %s133
      %p142 = scmp.eq.s32.totalorder %s18, 11
      %p143 = por %p141, %p142
      %p144 = scmp.ne.s32.totalorder %s133, %s134
      %p145 = scmp.eq.s32.totalorder %s18, 0
      %p146 = por %p144, %p145
      %p147 = scmp.ne.s32.totalorder %s133, %s134
      %p148 = scmp.eq.s32.totalorder %s19, 11
      %p149 = por %p147, %p148
      %p151 = scmp.ne.s32.totalorder %s134, %s150
      %p152 = scmp.eq.s32.totalorder %s19, 0
      %p153 = por %p151, %p152
      %s154 = ssub.s32 %s20, %s39
      %s155 = ssub.s32 %s21, %s35
      %s156 = sor.u32 %s154, %s155
      %p157 = scmp.eq.s32.totalorder %s156, 0
      %s159 = sadd.s32 %s158, 1
      %s160 = scalar_select %p157, %s158, %s159
      %p163 = pneg %p157
      %p164 = scmp.eq.s32.totalorder %s13, 11
      %p165 = por %p163, %p164
      %p166 = scmp.ne.s32.totalorder %s158, %s161
      %p167 = scmp.eq.s32.totalorder %s13, 0
      %p168 = por %p166, %p167
      %p169 = scmp.ne.s32.totalorder %s158, %s161
      %p170 = scmp.eq.s32.totalorder %s18, 11
      %p171 = por %p169, %p170
      %p172 = scmp.ne.s32.totalorder %s161, %s162
      %p173 = scmp.eq.s32.totalorder %s18, 0
      %p174 = por %p172, %p173
      %p175 = scmp.ne.s32.totalorder %s161, %s162
      %p176 = scmp.eq.s32.totalorder %s19, 11
      %p177 = por %p175, %p176
      %p179 = scmp.ne.s32.totalorder %s162, %s178
      %p180 = scmp.eq.s32.totalorder %s19, 0
      %p181 = por %p179, %p180
      %p182 = scmp.le.s32.totalorder 1, %s13
      %p183 = scmp.lt.s32.totalorder %s13, 13
      %p184 = pnand %p182, %p183
      %p185 = pneg %p184
      // Predicated region
      $region9: #{tpu_custom_call.1} parent=5 // pred_check
        _
      $region10: #{tpu_custom_call.1} parent=5 // pred_check_branch
        %187 = sbr.rel (%p184) target = $region12
      $region11: #{tpu_custom_call.1} parent=5 // pred_region
        %s188 = ssub.s32 %s13, 1
      $region12: #{tpu_custom_call.1} parent=5 // pred_fallthru
        _
      %p189 = scmp.lt.s32.totalorder %s13, 12
      // Predicated region
      $region13: #{tpu_custom_call.1} parent=5 // pred_check
        %p190 = pneg %p189
      $region14: #{tpu_custom_call.1} parent=5 // pred_check_branch
        %192 = sbr.rel (%p190) target = $region16
      $region15: #{tpu_custom_call.1} parent=5 // pred_region
        // Predicated region
        $region17: #{tpu_custom_call.1} parent=15 // pred_check
          %p193 = pneg %p54
        $region18: #{tpu_custom_call.1} parent=15 // pred_check_branch
          %195 = sbr.rel (%p193) target = $region20
        $region19: #{tpu_custom_call.1} parent=15 // pred_region
          %s196 = smul.u32 16, %s21
          %p197 = scmp.lt.s32.totalorder %s20, 1
          %s198 = scalar_select %p197, %s20, 1
          %p199 = scmp.lt.s32.totalorder %s196, 31
          %s200 = scalar_select %p199, %s196, 31
          %s201 = smul.addr %s198, 32
          %s202 = sadd.s32 %s200, %s201
          %s203 = smul.addr %s202, 4
          %s204 = scalar_lea.vmem %s0, %s203
          %s205 = smul.u32 16, %s21
        $region20: #{tpu_custom_call.1} parent=15 // pred_fallthru
          _
        // Predicated region
        $region21: #{tpu_custom_call.1} parent=15 // pred_check
          %p206 = pneg %p82
        $region22: #{tpu_custom_call.1} parent=15 // pred_check_branch
          %208 = sbr.rel (%p206) target = $region24
        $region23: #{tpu_custom_call.1} parent=15 // pred_region
          %s209 = smul.u32 16, %s22
          %p210 = scmp.lt.s32.totalorder %s20, 1
          %s211 = scalar_select %p210, %s20, 1
          %p212 = scmp.lt.s32.totalorder %s209, 47
          %s213 = scalar_select %p212, %s209, 47
          %s214 = smul.addr %s211, 48
          %s215 = sadd.s32 %s213, %s214
          %s216 = smul.addr %s215, 4
          %s217 = scalar_lea.vmem %s1, %s216
          %s218 = smul.u32 16, %s22
        $region24: #{tpu_custom_call.1} parent=15 // pred_fallthru
          _
        // Predicated region
        $region25: #{tpu_custom_call.1} parent=15 // pred_check
          %p219 = pneg %p110
        $region26: #{tpu_custom_call.1} parent=15 // pred_check_branch
          %221 = sbr.rel (%p219) target = $region28
        $region27: #{tpu_custom_call.1} parent=15 // pred_region
          %s222 = smul.u32 16, %s22
          %p223 = scmp.lt.s32.totalorder %s20, 1
          %s224 = scalar_select %p223, %s20, 1
          %p225 = scmp.lt.s32.totalorder %s222, 47
          %s226 = scalar_select %p225, %s222, 47
          %s227 = smul.addr %s224, 48
          %s228 = sadd.s32 %s226, %s227
          %s229 = smul.addr %s228, 4
          %s230 = scalar_lea.vmem %s2, %s229
          %s231 = smul.u32 16, %s22
        $region28: #{tpu_custom_call.1} parent=15 // pred_fallthru
          _
        // Predicated region
        $region29: #{tpu_custom_call.1} parent=15 // pred_check
          %p232 = pneg %p140
        $region30: #{tpu_custom_call.1} parent=15 // pred_check_branch
          %234 = sbr.rel (%p232) target = $region32
        $region31: #{tpu_custom_call.1} parent=15 // pred_region
          %s235 = sand.u32 %s130, 1
          %s236 = sand.u32 %s130, 1
          %s237 = smul.addr %s236, 32
          %s238 = scalar_lea.vmem [#allocation6], %s237
          %s239 = smul.u32 4, %s21
          %s240 = smul.addr %s239, 3
          %s241 = sadd.s32 %s22, %s240
          %s242 = smul.addr %s20, 24
          %s243 = sadd.s32 %s241, %s242
          %s244 = smul.addr %s243, 8
          %s245 = scalar_lea.vmem %s3, %s244
          // Predicated region
          $region33: #{tpu_custom_call.1} parent=31 // pred_check
            _
          $region34: #{tpu_custom_call.1} parent=31 // pred_check_branch
            %247 = sbr.rel (0) target = $region36
          $region35: #{tpu_custom_call.1} parent=31 // pred_region
            // Predicated region
            $region37: #{tpu_custom_call.1} parent=35 // pred_check
              _
            $region38: #{tpu_custom_call.1} parent=35 // pred_check_branch
              %249 = sbr.rel (0) target = $region40
            $region39: #{tpu_custom_call.1} parent=35 // pred_region
              // Predicated region
              $region52: #{tpu_custom_call.1} parent=39 // pred_check
                _
              $region53: #{tpu_custom_call.1} parent=39 // pred_check_branch
                %271 = sbr.rel (0) target = $region55
              $region54: #{tpu_custom_call.1} parent=39 // pred_region
                loop: start=0, step=1, limit=1
                $region56: #{tpu_custom_call.1} parent=54 // loop_pre_header
                  _
                $region57: #{tpu_custom_call.1} parent=54 // loop_header
                  %s273 = sphi 0, %s277
                  %p274 = scmp.ge.s32.totalorder %s273, 1
                  %s278 = sphi %s245, %s245
                  %s279 = sphi %s238, %s238
                $region58: #{tpu_custom_call.1} parent=54 // loop_header_branch
                  %276 = sbr.rel (%p274) target = $region62
                $region59: #{tpu_custom_call.1} parent=54 // loop_body
                  %v280 = vld [vmem:[%s278] sm:$0xff]
                  %281 = vst [vmem:[%s279] sm:$0xff] %v280
                  %v282 = vld [vmem:[%s278 + $0x18] sm:$0xff]
                  %283 = vst [vmem:[%s279 + $0x8] sm:$0xff] %v282
                  %v284 = vld [vmem:[%s278 + $0x30] sm:$0xff]
                  %285 = vst [vmem:[%s279 + $0x10] sm:$0xff] %v284
                  %v286 = vld [vmem:[%s278 + $0x48] sm:$0xff]
                  %287 = vst [vmem:[%s279 + $0x18] sm:$0xff] %v286
                $region60: #{tpu_custom_call.1} parent=54 // loop_footer
                  %s277 = sadd.s32 1, %s273
                $region61: #{tpu_custom_call.1} parent=54 // loop_footer_branch
                  %272 = sbr.rel target = $region57
                $region62: #{tpu_custom_call.1} parent=54 // loop_exit
                  _
              $region55: #{tpu_custom_call.1} parent=39 // pred_fallthru
                _
              // Predicated region
              $region63: #{tpu_custom_call.1} parent=39 // pred_check
                _
              $region64: #{tpu_custom_call.1} parent=39 // pred_check_branch
                %289 = sbr.rel target = $region66
              $region65: #{tpu_custom_call.1} parent=39 // pred_region
                _
              $region66: #{tpu_custom_call.1} parent=39 // pred_fallthru
                _
            $region40: #{tpu_custom_call.1} parent=35 // pred_fallthru
              _
            // Predicated region
            $region41: #{tpu_custom_call.1} parent=35 // pred_check
              _
            $region42: #{tpu_custom_call.1} parent=35 // pred_check_branch
              %251 = sbr.rel target = $region44
            $region43: #{tpu_custom_call.1} parent=35 // pred_region
              %s253 = ssub.s32 256, 1
              loop: start=0, step=1, limit=1
              $region45: #{tpu_custom_call.1} parent=43 // loop_pre_header
                _
              $region46: #{tpu_custom_call.1} parent=43 // loop_header
                %s255 = sphi 0, %s259
                %p256 = scmp.ge.s32.totalorder %s255, 1
                %s260 = sphi %s245, %s245
                %s261 = sphi %s238, %s238
              $region47: #{tpu_custom_call.1} parent=43 // loop_header_branch
                %258 = sbr.rel (%p256) target = $region51
              $region48: #{tpu_custom_call.1} parent=43 // loop_body
                %v262 = vld [vmem:[%s260] sm:%s253]
                %263 = vst [vmem:[%s261] sm:%s253] %v262
                %v264 = vld [vmem:[%s260 + $0x18] sm:%s253]
                %265 = vst [vmem:[%s261 + $0x8] sm:%s253] %v264
                %v266 = vld [vmem:[%s260 + $0x30] sm:%s253]
                %267 = vst [vmem:[%s261 + $0x10] sm:%s253] %v266
                %v268 = vld [vmem:[%s260 + $0x48] sm:%s253]
                %269 = vst [vmem:[%s261 + $0x18] sm:%s253] %v268
              $region49: #{tpu_custom_call.1} parent=43 // loop_footer
                %s259 = sadd.s32 1, %s255
              $region50: #{tpu_custom_call.1} parent=43 // loop_footer_branch
                %254 = sbr.rel target = $region46
              $region51: #{tpu_custom_call.1} parent=43 // loop_exit
                _
            $region44: #{tpu_custom_call.1} parent=35 // pred_fallthru
              _
          $region36: #{tpu_custom_call.1} parent=31 // pred_fallthru
            _
          %290 = vnop
        $region32: #{tpu_custom_call.1} parent=15 // pred_fallthru
          _
      $region16: #{tpu_custom_call.1} parent=5 // pred_fallthru
        _
      %p291 = scmp.le.s32.totalorder 1, %s13
      %p292 = scmp.lt.s32.totalorder %s13, 13
      %p293 = pnand %p291, %p292
      %p294 = pneg %p293
      // Predicated region
      $region67: #{tpu_custom_call.1} parent=5 // pred_check
        _
      $region68: #{tpu_custom_call.1} parent=5 // pred_check_branch
        %296 = sbr.rel (%p293) target = $region70
      $region69: #{tpu_custom_call.1} parent=5 // pred_region
        %s297 = ssub.s32 %s13, 1
        %s298 = sand.u32 %s133, 1
        %s299 = sand.u32 %s133, 1
        %s300 = smul.addr %s299, 32
        %s301 = scalar_lea.vmem [#allocation6], %s300
        // Predicated region
        $region71: #{tpu_custom_call.1} parent=69 // pred_check
          %p302 = pneg %p146
        $region72: #{tpu_custom_call.1} parent=69 // pred_check_branch
          %304 = sbr.rel (%p302) target = $region74
        $region73: #{tpu_custom_call.1} parent=69 // pred_region
          _
        $region74: #{tpu_custom_call.1} parent=69 // pred_fallthru
          _
        %s305 = smul.u32 16, %s24
        %p306 = scmp.lt.s32.totalorder %s23, 1
        %s307 = scalar_select %p306, %s23, 1
        %p308 = scmp.lt.s32.totalorder %s305, 31
        %s309 = scalar_select %p308, %s305, 31
        %s310 = smul.addr %s307, 32
        %s311 = sadd.s32 %s309, %s310
        %s312 = smul.addr %s311, 4
        %s313 = scalar_lea.vmem %s0, %s312
        %p314 = pneg %p60
        %p315 = pneg %p57
        %s316 = smul.u32 16, %s25
        %p317 = scmp.lt.s32.totalorder %s23, 1
        %s318 = scalar_select %p317, %s23, 1
        %p319 = scmp.lt.s32.totalorder %s316, 47
        %s320 = scalar_select %p319, %s316, 47
        %s321 = smul.addr %s318, 48
        %s322 = sadd.s32 %s320, %s321
        %s323 = smul.addr %s322, 4
        %s324 = scalar_lea.vmem %s1, %s323
        %p325 = pneg %p88
        %p326 = pneg %p85
        %s327 = smul.u32 16, %s25
        %p328 = scmp.lt.s32.totalorder %s23, 1
        %s329 = scalar_select %p328, %s23, 1
        %p330 = scmp.lt.s32.totalorder %s327, 47
        %s331 = scalar_select %p330, %s327, 47
        %s332 = smul.addr %s329, 48
        %s333 = sadd.s32 %s331, %s332
        %s334 = smul.addr %s333, 4
        %s335 = scalar_lea.vmem %s2, %s334
        %p336 = pneg %p116
        %p337 = pneg %p113
        %s338 = sand.u32 %s133, 1
        %s339 = sand.u32 %s133, 1
        %s340 = smul.addr %s339, 32
        %s341 = scalar_lea.vmem [#allocation6], %s340
        %p342 = pneg %p146
        %p343 = pneg %p143
        %p344 = pneg %p174
        %p345 = pneg %p171
        %s346 = sand.u32 %s161, 1
        %s347 = scalar_lea.sflag [#allocation8], %s346
        %s348 = sand.u32 %s161, 1
        %s349 = smul.addr %s348, 128
        %s350 = scalar_lea.vmem [#allocation7], %s349
        %s351 = smul.u32 16, %s24
        %p352 = scmp.lt.s32.totalorder %s23, 1
        %s353 = scalar_select %p352, %s23, 1
        %p354 = scmp.lt.s32.totalorder %s351, 31
        %s355 = scalar_select %p354, %s351, 31
        %s356 = smul.addr %s353, 32
        %s357 = sadd.s32 %s355, %s356
        %s358 = smul.addr %s357, 4
        %s359 = scalar_lea.vmem %s0, %s358
        %s360 = smul.u32 16, %s24
        %s361 = smul.u32 16, %s25
        %p362 = scmp.lt.s32.totalorder %s23, 1
        %s363 = scalar_select %p362, %s23, 1
        %p364 = scmp.lt.s32.totalorder %s361, 47
        %s365 = scalar_select %p364, %s361, 47
        %s366 = smul.addr %s363, 48
        %s367 = sadd.s32 %s365, %s366
        %s368 = smul.addr %s367, 4
        %s369 = scalar_lea.vmem %s1, %s368
        %s370 = smul.u32 16, %s25
        %s371 = smul.u32 16, %s25
        %p372 = scmp.lt.s32.totalorder %s23, 1
        %s373 = scalar_select %p372, %s23, 1
        %p374 = scmp.lt.s32.totalorder %s371, 47
        %s375 = scalar_select %p374, %s371, 47
        %s376 = smul.addr %s373, 48
        %s377 = sadd.s32 %s375, %s376
        %s378 = smul.addr %s377, 4
        %s379 = scalar_lea.vmem %s2, %s378
        %s380 = smul.u32 16, %s25
        %s381 = smul.u32 4, %s24
        %s382 = smul.u32 16, %s24
        %p386 = scmp.eq.s32.totalorder %s25, 0
        // Predicated region
        $region75: #{tpu_custom_call.1} parent=69 // pred_check
          %p387 = pneg %p386
        $region76: #{tpu_custom_call.1} parent=69 // pred_check_branch
          %389 = sbr.rel (%p387) target = $region78
        $region77: #{tpu_custom_call.1} parent=69 // pred_region
          %vm390 = vcmask 7168
          %391 = vst.msk [vmem:[#allocation3] sm:$0xff] %vm390, -inf
          %392 = vst.msk [vmem:[#allocation3 + $0x8] sm:$0xff] %vm390, -inf
          %393 = vst.msk [vmem:[#allocation3 + $0x10] sm:$0xff] %vm390, -inf
          %394 = vst.msk [vmem:[#allocation3 + $0x18] sm:$0xff] %vm390, -inf
          %395 = vst.msk [vmem:[#allocation3 + $0x20] sm:$0xff] %vm390, -inf
          %396 = vst.msk [vmem:[#allocation3 + $0x28] sm:$0xff] %vm390, -inf
          %397 = vst.msk [vmem:[#allocation3 + $0x30] sm:$0xff] %vm390, -inf
          %398 = vst.msk [vmem:[#allocation3 + $0x38] sm:$0xff] %vm390, -inf
          %399 = vst.msk [vmem:[#allocation3 + $0x40] sm:$0xff] %vm390, -inf
          %400 = vst.msk [vmem:[#allocation3 + $0x48] sm:$0xff] %vm390, -inf
          %401 = vst.msk [vmem:[#allocation3 + $0x50] sm:$0xff] %vm390, -inf
          %402 = vst.msk [vmem:[#allocation3 + $0x58] sm:$0xff] %vm390, -inf
          %403 = vst.msk [vmem:[#allocation3 + $0x60] sm:$0xff] %vm390, -inf
          %404 = vst.msk [vmem:[#allocation3 + $0x68] sm:$0xff] %vm390, -inf
          %405 = vst.msk [vmem:[#allocation3 + $0x70] sm:$0xff] %vm390, -inf
          %406 = vst.msk [vmem:[#allocation3 + $0x78] sm:$0xff] %vm390, -inf
          %407 = vst.msk [vmem:[#allocation4] sm:$0xff] %vm390, 0.0
          %408 = vst.msk [vmem:[#allocation4 + $0x8] sm:$0xff] %vm390, 0.0
          %409 = vst.msk [vmem:[#allocation4 + $0x10] sm:$0xff] %vm390, 0.0
          %410 = vst.msk [vmem:[#allocation4 + $0x18] sm:$0xff] %vm390, 0.0
          %411 = vst.msk [vmem:[#allocation4 + $0x20] sm:$0xff] %vm390, 0.0
          %412 = vst.msk [vmem:[#allocation4 + $0x28] sm:$0xff] %vm390, 0.0
          %413 = vst.msk [vmem:[#allocation4 + $0x30] sm:$0xff] %vm390, 0.0
          %414 = vst.msk [vmem:[#allocation4 + $0x38] sm:$0xff] %vm390, 0.0
          %415 = vst.msk [vmem:[#allocation4 + $0x40] sm:$0xff] %vm390, 0.0
          %416 = vst.msk [vmem:[#allocation4 + $0x48] sm:$0xff] %vm390, 0.0
          %417 = vst.msk [vmem:[#allocation4 + $0x50] sm:$0xff] %vm390, 0.0
          %418 = vst.msk [vmem:[#allocation4 + $0x58] sm:$0xff] %vm390, 0.0
          %419 = vst.msk [vmem:[#allocation4 + $0x60] sm:$0xff] %vm390, 0.0
          %420 = vst.msk [vmem:[#allocation4 + $0x68] sm:$0xff] %vm390, 0.0
          %421 = vst.msk [vmem:[#allocation4 + $0x70] sm:$0xff] %vm390, 0.0
          %422 = vst.msk [vmem:[#allocation4 + $0x78] sm:$0xff] %vm390, 0.0
          %423 = vst [vmem:[#allocation5] sm:$0xff] 0.0
          %424 = vst [vmem:[#allocation5 + $0x8] sm:$0xff] 0.0
          %425 = vst [vmem:[#allocation5 + $0x10] sm:$0xff] 0.0
          %426 = vst [vmem:[#allocation5 + $0x18] sm:$0xff] 0.0
          %427 = vst [vmem:[#allocation5 + $0x20] sm:$0xff] 0.0
          %428 = vst [vmem:[#allocation5 + $0x28] sm:$0xff] 0.0
          %429 = vst [vmem:[#allocation5 + $0x30] sm:$0xff] 0.0
          %430 = vst [vmem:[#allocation5 + $0x38] sm:$0xff] 0.0
          %431 = vst [vmem:[#allocation5 + $0x40] sm:$0xff] 0.0
          %432 = vst [vmem:[#allocation5 + $0x48] sm:$0xff] 0.0
          %433 = vst [vmem:[#allocation5 + $0x50] sm:$0xff] 0.0
          %434 = vst [vmem:[#allocation5 + $0x58] sm:$0xff] 0.0
          %435 = vst [vmem:[#allocation5 + $0x60] sm:$0xff] 0.0
          %436 = vst [vmem:[#allocation5 + $0x68] sm:$0xff] 0.0
          %437 = vst [vmem:[#allocation5 + $0x70] sm:$0xff] 0.0
          %438 = vst [vmem:[#allocation5 + $0x78] sm:$0xff] 0.0
          %v439 = vld [vmem:[%s359] sm:$0xf]
          %v440 = vld [vmem:[%s359 + $0x4] sm:$0xf]
          %v441 = vld [vmem:[%s359 + $0x8] sm:$0xf]
          %v442 = vld [vmem:[%s359 + $0xc] sm:$0xf]
          %v443 = vld [vmem:[%s359 + $0x10] sm:$0xf]
          %v444 = vld [vmem:[%s359 + $0x14] sm:$0xf]
          %v445 = vld [vmem:[%s359 + $0x18] sm:$0xf]
          %v446 = vld [vmem:[%s359 + $0x1c] sm:$0xf]
          %v447 = vld [vmem:[%s359 + $0x20] sm:$0xf]
          %v448 = vld [vmem:[%s359 + $0x24] sm:$0xf]
          %v449 = vld [vmem:[%s359 + $0x28] sm:$0xf]
          %v450 = vld [vmem:[%s359 + $0x2c] sm:$0xf]
          %v451 = vld [vmem:[%s359 + $0x30] sm:$0xf]
          %v452 = vld [vmem:[%s359 + $0x34] sm:$0xf]
          %v453 = vld [vmem:[%s359 + $0x38] sm:$0xf]
          %v454 = vld [vmem:[%s359 + $0x3c] sm:$0xf]
          %v455 = vunpack.c.l.bf16 %v439
          %v456 = vunpack.c.l.bf16 %v440
          %v457 = vunpack.c.l.bf16 %v441
          %v458 = vunpack.c.l.bf16 %v442
          %v459 = vunpack.c.l.bf16 %v443
          %v460 = vunpack.c.l.bf16 %v444
          %v461 = vunpack.c.l.bf16 %v445
          %v462 = vunpack.c.l.bf16 %v446
          %v463 = vunpack.c.l.bf16 %v447
          %v464 = vunpack.c.l.bf16 %v448
          %v465 = vunpack.c.l.bf16 %v449
          %v466 = vunpack.c.l.bf16 %v450
          %v467 = vunpack.c.l.bf16 %v451
          %v468 = vunpack.c.l.bf16 %v452
          %v469 = vunpack.c.l.bf16 %v453
          %v470 = vunpack.c.l.bf16 %v454
          %v471 = vmul.f32 %v455, 0.125
          %v472 = vmul.f32 %v456, 0.125
          %v473 = vmul.f32 %v457, 0.125
          %v474 = vmul.f32 %v458, 0.125
          %v475 = vmul.f32 %v459, 0.125
          %v476 = vmul.f32 %v460, 0.125
          %v477 = vmul.f32 %v461, 0.125
          %v478 = vmul.f32 %v462, 0.125
          %v479 = vmul.f32 %v463, 0.125
          %v480 = vmul.f32 %v464, 0.125
          %v481 = vmul.f32 %v465, 0.125
          %v482 = vmul.f32 %v466, 0.125
          %v483 = vmul.f32 %v467, 0.125
          %v484 = vmul.f32 %v468, 0.125
          %v485 = vmul.f32 %v469, 0.125
          %v486 = vmul.f32 %v470, 0.125
          %v487 = vpack.c.bf16 %v472, %v471
          %v488 = vpack.c.bf16 %v474, %v473
          %v489 = vpack.c.bf16 %v476, %v475
          %v490 = vpack.c.bf16 %v478, %v477
          %v491 = vpack.c.bf16 %v480, %v479
          %v492 = vpack.c.bf16 %v482, %v481
          %v493 = vpack.c.bf16 %v484, %v483
          %v494 = vpack.c.bf16 %v486, %v485
          %v503 = vunpack.c.l.b16 %v487
          %v504 = vunpack.c.h.b16 %v487
          %v505 = vunpack.c.l.b16 %v488
          %v506 = vunpack.c.h.b16 %v488
          %v507 = vunpack.c.l.b16 %v489
          %v508 = vunpack.c.h.b16 %v489
          %v509 = vunpack.c.l.b16 %v490
          %v510 = vunpack.c.h.b16 %v490
          %v511 = vunpack.c.l.b16 %v491
          %v512 = vunpack.c.h.b16 %v491
          %v513 = vunpack.c.l.b16 %v492
          %v514 = vunpack.c.h.b16 %v492
          %v515 = vunpack.c.l.b16 %v493
          %v516 = vunpack.c.h.b16 %v493
          %v517 = vunpack.c.l.b16 %v494
          %v518 = vunpack.c.h.b16 %v494
          %v519 = vpack.c.b16 %v503, %v503
          %v520 = vpack.c.b16 %v504, %v504
          %v521 = vpack.c.b16 %v505, %v505
          %v522 = vpack.c.b16 %v506, %v506
          %v523 = vpack.c.b16 %v507, %v507
          %v524 = vpack.c.b16 %v508, %v508
          %v525 = vpack.c.b16 %v509, %v509
          %v526 = vpack.c.b16 %v510, %v510
          %v527 = vpack.c.b16 %v511, %v511
          %v528 = vpack.c.b16 %v512, %v512
          %v529 = vpack.c.b16 %v513, %v513
          %v530 = vpack.c.b16 %v514, %v514
          %v531 = vpack.c.b16 %v515, %v515
          %v532 = vpack.c.b16 %v516, %v516
          %v533 = vpack.c.b16 %v517, %v517
          %v534 = vpack.c.b16 %v518, %v518
          %vm551 = vcmask 519168
          %552 = vst.msk [vmem:[#allocation2] sm:$0xf] %vm551, %v519
          %553 = vst.msk [vmem:[#allocation2 + $0x4] sm:$0xf] %vm551, %v520
          %554 = vst.msk [vmem:[#allocation2 + $0x8] sm:$0xf] %vm551, %v521
          %555 = vst.msk [vmem:[#allocation2 + $0xc] sm:$0xf] %vm551, %v522
          %556 = vst.msk [vmem:[#allocation2 + $0x10] sm:$0xf] %vm551, %v523
          %557 = vst.msk [vmem:[#allocation2 + $0x14] sm:$0xf] %vm551, %v524
          %558 = vst.msk [vmem:[#allocation2 + $0x18] sm:$0xf] %vm551, %v525
          %559 = vst.msk [vmem:[#allocation2 + $0x1c] sm:$0xf] %vm551, %v526
          %560 = vst.msk [vmem:[#allocation2 + $0x20] sm:$0xf] %vm551, %v527
          %561 = vst.msk [vmem:[#allocation2 + $0x24] sm:$0xf] %vm551, %v528
          %562 = vst.msk [vmem:[#allocation2 + $0x28] sm:$0xf] %vm551, %v529
          %563 = vst.msk [vmem:[#allocation2 + $0x2c] sm:$0xf] %vm551, %v530
          %564 = vst.msk [vmem:[#allocation2 + $0x30] sm:$0xf] %vm551, %v531
          %565 = vst.msk [vmem:[#allocation2 + $0x34] sm:$0xf] %vm551, %v532
          %566 = vst.msk [vmem:[#allocation2 + $0x38] sm:$0xf] %vm551, %v533
          %567 = vst.msk [vmem:[#allocation2 + $0x3c] sm:$0xf] %vm551, %v534
        $region78: #{tpu_custom_call.1} parent=69 // pred_fallthru
          _
        %v568 = vld [vmem:[#allocation2] sm:$0xf]
        %v569 = vld [vmem:[#allocation2 + $0x4] sm:$0xf]
        %v570 = vld [vmem:[#allocation2 + $0x8] sm:$0xf]
        %v571 = vld [vmem:[#allocation2 + $0xc] sm:$0xf]
        %v572 = vld [vmem:[#allocation2 + $0x10] sm:$0xf]
        %v573 = vld [vmem:[#allocation2 + $0x14] sm:$0xf]
        %v574 = vld [vmem:[#allocation2 + $0x18] sm:$0xf]
        %v575 = vld [vmem:[#allocation2 + $0x1c] sm:$0xf]
        %v576 = vld [vmem:[#allocation2 + $0x20] sm:$0xf]
        %v577 = vld [vmem:[#allocation2 + $0x24] sm:$0xf]
        %v578 = vld [vmem:[#allocation2 + $0x28] sm:$0xf]
        %v579 = vld [vmem:[#allocation2 + $0x2c] sm:$0xf]
        %v580 = vld [vmem:[#allocation2 + $0x30] sm:$0xf]
        %v581 = vld [vmem:[#allocation2 + $0x34] sm:$0xf]
        %v582 = vld [vmem:[#allocation2 + $0x38] sm:$0xf]
        %v583 = vld [vmem:[#allocation2 + $0x3c] sm:$0xf]
        %v584 = vld [vmem:[%s369] sm:$0xf]
        %v585 = vld [vmem:[%s369 + $0x4] sm:$0xf]
        %v586 = vld [vmem:[%s369 + $0x8] sm:$0xf]
        %v587 = vld [vmem:[%s369 + $0xc] sm:$0xf]
        %v588 = vld [vmem:[%s369 + $0x10] sm:$0xf]
        %v589 = vld [vmem:[%s369 + $0x14] sm:$0xf]
        %v590 = vld [vmem:[%s369 + $0x18] sm:$0xf]
        %v591 = vld [vmem:[%s369 + $0x1c] sm:$0xf]
        %v592 = vld [vmem:[%s369 + $0x20] sm:$0xf]
        %v593 = vld [vmem:[%s369 + $0x24] sm:$0xf]
        %v594 = vld [vmem:[%s369 + $0x28] sm:$0xf]
        %v595 = vld [vmem:[%s369 + $0x2c] sm:$0xf]
        %v596 = vld [vmem:[%s369 + $0x30] sm:$0xf]
        %v597 = vld [vmem:[%s369 + $0x34] sm:$0xf]
        %v598 = vld [vmem:[%s369 + $0x38] sm:$0xf]
        %v599 = vld [vmem:[%s369 + $0x3c] sm:$0xf]
        %v616 = vunpack.c.l.b16 %v568
        %v617 = vunpack.c.l.b16 %v569
        %v618 = vunpack.c.l.b16 %v570
        %v619 = vunpack.c.l.b16 %v571
        %v620 = vunpack.c.l.b16 %v572
        %v621 = vunpack.c.l.b16 %v573
        %v622 = vunpack.c.l.b16 %v574
        %v623 = vunpack.c.l.b16 %v575
        %v624 = vunpack.c.l.b16 %v576
        %v625 = vunpack.c.l.b16 %v577
        %v626 = vunpack.c.l.b16 %v578
        %v627 = vunpack.c.l.b16 %v579
        %v628 = vunpack.c.l.b16 %v580
        %v629 = vunpack.c.l.b16 %v581
        %v630 = vunpack.c.l.b16 %v582
        %v631 = vunpack.c.l.b16 %v583
        %v632 = vpack.c.b16 %v617, %v616
        %v633 = vpack.c.b16 %v619, %v618
        %v634 = vpack.c.b16 %v621, %v620
        %v635 = vpack.c.b16 %v623, %v622
        %v636 = vpack.c.b16 %v625, %v624
        %v637 = vpack.c.b16 %v627, %v626
        %v638 = vpack.c.b16 %v629, %v628
        %v639 = vpack.c.b16 %v631, %v630
        %v656 = vunpack.c.l.b16 %v584
        %v657 = vunpack.c.l.b16 %v585
        %v658 = vunpack.c.l.b16 %v586
        %v659 = vunpack.c.l.b16 %v587
        %v660 = vunpack.c.l.b16 %v588
        %v661 = vunpack.c.l.b16 %v589
        %v662 = vunpack.c.l.b16 %v590
        %v663 = vunpack.c.l.b16 %v591
        %v664 = vunpack.c.l.b16 %v592
        %v665 = vunpack.c.l.b16 %v593
        %v666 = vunpack.c.l.b16 %v594
        %v667 = vunpack.c.l.b16 %v595
        %v668 = vunpack.c.l.b16 %v596
        %v669 = vunpack.c.l.b16 %v597
        %v670 = vunpack.c.l.b16 %v598
        %v671 = vunpack.c.l.b16 %v599
        %v672 = vpack.c.b16 %v657, %v656
        %v673 = vpack.c.b16 %v659, %v658
        %v674 = vpack.c.b16 %v661, %v660
        %v675 = vpack.c.b16 %v663, %v662
        %v676 = vpack.c.b16 %v665, %v664
        %v677 = vpack.c.b16 %v667, %v666
        %v678 = vpack.c.b16 %v669, %v668
        %v679 = vpack.c.b16 %v671, %v670
        %vm680 = vcmask 523264
        %v682 = vsel %vm680, %v632, 0
        %v685 = vsel %vm680, %v633, 0
        %v688 = vsel %vm680, %v634, 0
        %v691 = vsel %vm680, %v635, 0
        %v694 = vsel %vm680, %v636, 0
        %v697 = vsel %vm680, %v637, 0
        %v700 = vsel %vm680, %v638, 0
        %v703 = vsel %vm680, %v639, 0
        %v706 = vsel %vm680, %v672, 0
        %v709 = vsel %vm680, %v673, 0
        %v712 = vsel %vm680, %v674, 0
        %v715 = vsel %vm680, %v675, 0
        %v718 = vsel %vm680, %v676, 0
        %v721 = vsel %vm680, %v677, 0
        %v724 = vsel %vm680, %v678, 0
        %v727 = vsel %vm680, %v679, 0
        %729 = vmatprep.subr.bf16.mxu0 0
        %730 = vmatpush1.bf16.xpose.msra.mxu0 %v727
        %731 = vmatprep.subr.bf16.mxu0 0
        %732 = vmatpush1.bf16.xpose.msra.mxu0 %v724
        %733 = vmatprep.subr.bf16.mxu0 0
        %734 = vmatpush1.bf16.xpose.msra.mxu0 %v721
        %735 = vmatprep.subr.bf16.mxu0 0
        %736 = vmatpush1.bf16.xpose.msra.mxu0 %v718
        %737 = vmatprep.subr.bf16.mxu0 0
        %738 = vmatpush1.bf16.xpose.msra.mxu0 %v715
        %739 = vmatprep.subr.bf16.mxu0 0
        %740 = vmatpush1.bf16.xpose.msra.mxu0 %v712
        %741 = vmatprep.subr.bf16.mxu0 0
        %742 = vmatpush1.bf16.xpose.msra.mxu0 %v709
        %743 = vmatprep.subr.bf16.mxu0 0
        %744 = vmatpush1.bf16.xpose.msra.mxu0 %v706
        %745 = vmatprep.subr.bf16.mxu0 0
        %746 = vmatpush2.bf16.xpose.msra.mxu0 0
        %747 = vmatprep.subr.bf16.mxu0 0
        %748 = vmatpush2.bf16.xpose.msra.mxu0 0
        %749 = vmatprep.subr.bf16.mxu0 0
        %750 = vmatpush2.bf16.xpose.msra.mxu0 0
        %751 = vmatprep.subr.bf16.mxu0 0
        %752 = vmatpush2.bf16.xpose.msra.mxu0 0
        %753 = vmatprep.subr.bf16.mxu0 0
        %754 = vmatpush2.bf16.xpose.msra.mxu0 0
        %755 = vmatprep.subr.bf16.mxu0 0
        %756 = vmatpush2.bf16.xpose.msra.mxu0 0
        %757 = vmatprep.subr.bf16.mxu0 0
        %758 = vmatpush2.bf16.xpose.msra.mxu0 0
        %759 = vmatprep.subr.bf16.mxu0 0
        %760 = vmatpush2.bf16.xpose.msra.mxu0 0
        %761 = vmatprep.mubr.bf16.mxu0 0
        %762 = vmatmul.mubr.bf16.gmra.mxu0 %v682
        %v763 = vpop.f32.mrf.mxu0
        %v764 = vadd.f32 0.0, %v763
        %v765 = vpop.f32.mrf.mxu0
        %v766 = vpop.f32.mrf.mxu0
        %v767 = vadd.f32 0.0, %v766
        %v768 = vpop.f32.mrf.mxu0
        %769 = vmatprep.mubr.bf16.mxu0 0
        %770 = vmatmul.mubr.bf16.gmra.mxu0 %v685
        %v771 = vpop.f32.mrf.mxu0
        %v772 = vadd.f32 0.0, %v771
        %v773 = vpop.f32.mrf.mxu0
        %v774 = vpop.f32.mrf.mxu0
        %v775 = vadd.f32 0.0, %v774
        %v776 = vpop.f32.mrf.mxu0
        %777 = vmatprep.mubr.bf16.mxu0 0
        %778 = vmatmul.mubr.bf16.gmra.mxu0 %v688
        %v779 = vpop.f32.mrf.mxu0
        %v780 = vadd.f32 0.0, %v779
        %v781 = vpop.f32.mrf.mxu0
        %v782 = vpop.f32.mrf.mxu0
        %v783 = vadd.f32 0.0, %v782
        %v784 = vpop.f32.mrf.mxu0
        %785 = vmatprep.mubr.bf16.mxu0 0
        %786 = vmatmul.mubr.bf16.gmra.mxu0 %v691
        %v787 = vpop.f32.mrf.mxu0
        %v788 = vadd.f32 0.0, %v787
        %v789 = vpop.f32.mrf.mxu0
        %v790 = vpop.f32.mrf.mxu0
        %v791 = vadd.f32 0.0, %v790
        %v792 = vpop.f32.mrf.mxu0
        %793 = vmatprep.mubr.bf16.mxu0 0
        %794 = vmatmul.mubr.bf16.gmra.mxu0 %v694
        %v795 = vpop.f32.mrf.mxu0
        %v796 = vadd.f32 0.0, %v795
        %v797 = vpop.f32.mrf.mxu0
        %v798 = vpop.f32.mrf.mxu0
        %v799 = vadd.f32 0.0, %v798
        %v800 = vpop.f32.mrf.mxu0
        %801 = vmatprep.mubr.bf16.mxu0 0
        %802 = vmatmul.mubr.bf16.gmra.mxu0 %v697
        %v803 = vpop.f32.mrf.mxu0
        %v804 = vadd.f32 0.0, %v803
        %v805 = vpop.f32.mrf.mxu0
        %v806 = vpop.f32.mrf.mxu0
        %v807 = vadd.f32 0.0, %v806
        %v808 = vpop.f32.mrf.mxu0
        %809 = vmatprep.mubr.bf16.mxu0 0
        %810 = vmatmul.mubr.bf16.gmra.mxu0 %v700
        %v811 = vpop.f32.mrf.mxu0
        %v812 = vadd.f32 0.0, %v811
        %v813 = vpop.f32.mrf.mxu0
        %v814 = vpop.f32.mrf.mxu0
        %v815 = vadd.f32 0.0, %v814
        %v816 = vpop.f32.mrf.mxu0
        %817 = vmatprep.mubr.bf16.mxu0 0
        %818 = vmatmul.mubr.bf16.gmra.mxu0 %v703
        %v819 = vpop.f32.mrf.mxu0
        %v820 = vadd.f32 0.0, %v819
        %v821 = vpop.f32.mrf.mxu0
        %v822 = vpop.f32.mrf.mxu0
        %v823 = vadd.f32 0.0, %v822
        %v824 = vpop.f32.mrf.mxu0
        %825 = vdwg.mxu0
        %v826 = vld [vmem:[%s301] sm:$0xff]
        %v827 = vld [vmem:[%s301 + $0x8] sm:$0xff]
        %v828 = vld [vmem:[%s301 + $0x10] sm:$0xff]
        %v829 = vld [vmem:[%s301 + $0x18] sm:$0xff]
        %vm830 = vnez %v826
        %vm831 = vnez %v827
        %vm832 = vnez %v828
        %vm833 = vnez %v829
        %v834 = vsel %vm830, 16843009, 0
        %v835 = vsel %vm831, 16843009, 0
        %v836 = vsel %vm832, 16843009, 0
        %v837 = vsel %vm833, 16843009, 0
        %v838 = vunpack.c.0.s8 %v834
        %v839 = vunpack.c.1.s8 %v834
        %v840 = vunpack.c.2.s8 %v834
        %v841 = vunpack.c.3.s8 %v834
        %v842 = vunpack.c.0.s8 %v835
        %v843 = vunpack.c.1.s8 %v835
        %v844 = vunpack.c.2.s8 %v835
        %v845 = vunpack.c.3.s8 %v835
        %v846 = vunpack.c.0.s8 %v836
        %v847 = vunpack.c.1.s8 %v836
        %v848 = vunpack.c.2.s8 %v836
        %v849 = vunpack.c.3.s8 %v836
        %v850 = vunpack.c.0.s8 %v837
        %v851 = vunpack.c.1.s8 %v837
        %v852 = vunpack.c.2.s8 %v837
        %v853 = vunpack.c.3.s8 %v837
        %v854 = vpack.c.b16 %v838, %v838
        %v855 = vpack.c.b8 %v854, %v854
        %v856 = vpack.c.b16 %v839, %v839
        %v857 = vpack.c.b8 %v856, %v856
        %v858 = vpack.c.b16 %v840, %v840
        %v859 = vpack.c.b8 %v858, %v858
        %v860 = vpack.c.b16 %v841, %v841
        %v861 = vpack.c.b8 %v860, %v860
        %v862 = vpack.c.b16 %v842, %v842
        %v863 = vpack.c.b8 %v862, %v862
        %v864 = vpack.c.b16 %v843, %v843
        %v865 = vpack.c.b8 %v864, %v864
        %v866 = vpack.c.b16 %v844, %v844
        %v867 = vpack.c.b8 %v866, %v866
        %v868 = vpack.c.b16 %v845, %v845
        %v869 = vpack.c.b8 %v868, %v868
        %v870 = vpack.c.b16 %v846, %v846
        %v871 = vpack.c.b8 %v870, %v870
        %v872 = vpack.c.b16 %v847, %v847
        %v873 = vpack.c.b8 %v872, %v872
        %v874 = vpack.c.b16 %v848, %v848
        %v875 = vpack.c.b8 %v874, %v874
        %v876 = vpack.c.b16 %v849, %v849
        %v877 = vpack.c.b8 %v876, %v876
        %v878 = vpack.c.b16 %v850, %v850
        %v879 = vpack.c.b8 %v878, %v878
        %v880 = vpack.c.b16 %v851, %v851
        %v881 = vpack.c.b8 %v880, %v880
        %v882 = vpack.c.b16 %v852, %v852
        %v883 = vpack.c.b8 %v882, %v882
        %v884 = vpack.c.b16 %v853, %v853
        %v885 = vpack.c.b8 %v884, %v884
        %vm886 = vnez %v855
        %vm887 = vnez %v857
        %vm888 = vnez %v859
        %vm889 = vnez %v861
        %vm890 = vnez %v863
        %vm891 = vnez %v865
        %vm892 = vnez %v867
        %vm893 = vnez %v869
        %vm894 = vnez %v871
        %vm895 = vnez %v873
        %vm896 = vnez %v875
        %vm897 = vnez %v877
        %vm898 = vnez %v879
        %vm899 = vnez %v881
        %vm900 = vnez %v883
        %vm901 = vnez %v885
        %v902 = vsel %vm886, 16843009, 0
        %v903 = vsel %vm887, 16843009, 0
        %v904 = vsel %vm888, 16843009, 0
        %v905 = vsel %vm889, 16843009, 0
        %v906 = vsel %vm890, 16843009, 0
        %v907 = vsel %vm891, 16843009, 0
        %v908 = vsel %vm892, 16843009, 0
        %v909 = vsel %vm893, 16843009, 0
        %v910 = vsel %vm894, 16843009, 0
        %v911 = vsel %vm895, 16843009, 0
        %v912 = vsel %vm896, 16843009, 0
        %v913 = vsel %vm897, 16843009, 0
        %v914 = vsel %vm898, 16843009, 0
        %v915 = vsel %vm899, 16843009, 0
        %v916 = vsel %vm900, 16843009, 0
        %v917 = vsel %vm901, 16843009, 0
        %v918 = vunpack.c.0.s8 %v902
        %v919 = vunpack.c.0.s8 %v903
        %v920 = vunpack.c.0.s8 %v904
        %v921 = vunpack.c.0.s8 %v905
        %v922 = vunpack.c.0.s8 %v906
        %v923 = vunpack.c.0.s8 %v907
        %v924 = vunpack.c.0.s8 %v908
        %v925 = vunpack.c.0.s8 %v909
        %v926 = vunpack.c.0.s8 %v910
        %v927 = vunpack.c.0.s8 %v911
        %v928 = vunpack.c.0.s8 %v912
        %v929 = vunpack.c.0.s8 %v913
        %v930 = vunpack.c.0.s8 %v914
        %v931 = vunpack.c.0.s8 %v915
        %v932 = vunpack.c.0.s8 %v916
        %v933 = vunpack.c.0.s8 %v917
        %vm934 = vcmp.ne.s32.totalorder %v918, 0
        %vm935 = vcmp.ne.s32.totalorder %v919, 0
        %vm936 = vcmp.ne.s32.totalorder %v920, 0
        %vm937 = vcmp.ne.s32.totalorder %v921, 0
        %vm938 = vcmp.ne.s32.totalorder %v922, 0
        %vm939 = vcmp.ne.s32.totalorder %v923, 0
        %vm940 = vcmp.ne.s32.totalorder %v924, 0
        %vm941 = vcmp.ne.s32.totalorder %v925, 0
        %vm942 = vcmp.ne.s32.totalorder %v926, 0
        %vm943 = vcmp.ne.s32.totalorder %v927, 0
        %vm944 = vcmp.ne.s32.totalorder %v928, 0
        %vm945 = vcmp.ne.s32.totalorder %v929, 0
        %vm946 = vcmp.ne.s32.totalorder %v930, 0
        %vm947 = vcmp.ne.s32.totalorder %v931, 0
        %vm948 = vcmp.ne.s32.totalorder %v932, 0
        %vm949 = vcmp.ne.s32.totalorder %v933, 0
        %v950 = vsel %vm934, -100000.0, %v764
        %v951 = vsel %vm935, -100000.0, %v767
        %v952 = vsel %vm936, -100000.0, %v772
        %v953 = vsel %vm937, -100000.0, %v775
        %v954 = vsel %vm938, -100000.0, %v780
        %v955 = vsel %vm939, -100000.0, %v783
        %v956 = vsel %vm940, -100000.0, %v788
        %v957 = vsel %vm941, -100000.0, %v791
        %v958 = vsel %vm942, -100000.0, %v796
        %v959 = vsel %vm943, -100000.0, %v799
        %v960 = vsel %vm944, -100000.0, %v804
        %v961 = vsel %vm945, -100000.0, %v807
        %v962 = vsel %vm946, -100000.0, %v812
        %v963 = vsel %vm947, -100000.0, %v815
        %v964 = vsel %vm948, -100000.0, %v820
        %v965 = vsel %vm949, -100000.0, %v823
        %v966 = vld [vmem:[#allocation3] sm:$0xff]
        %v967 = vld [vmem:[#allocation3 + $0x8] sm:$0xff]
        %v968 = vld [vmem:[#allocation3 + $0x10] sm:$0xff]
        %v969 = vld [vmem:[#allocation3 + $0x18] sm:$0xff]
        %v970 = vld [vmem:[#allocation3 + $0x20] sm:$0xff]
        %v971 = vld [vmem:[#allocation3 + $0x28] sm:$0xff]
        %v972 = vld [vmem:[#allocation3 + $0x30] sm:$0xff]
        %v973 = vld [vmem:[#allocation3 + $0x38] sm:$0xff]
        %v974 = vld [vmem:[#allocation3 + $0x40] sm:$0xff]
        %v975 = vld [vmem:[#allocation3 + $0x48] sm:$0xff]
        %v976 = vld [vmem:[#allocation3 + $0x50] sm:$0xff]
        %v977 = vld [vmem:[#allocation3 + $0x58] sm:$0xff]
        %v978 = vld [vmem:[#allocation3 + $0x60] sm:$0xff]
        %v979 = vld [vmem:[#allocation3 + $0x68] sm:$0xff]
        %v980 = vld [vmem:[#allocation3 + $0x70] sm:$0xff]
        %v981 = vld [vmem:[#allocation3 + $0x78] sm:$0xff]
        %982 = vmax.xlane.f32.xlu0 %v950
        %v983 = vpop.xlane.xlu0 %982
        %984 = vmax.xlane.f32.xlu0 %v951
        %v985 = vpop.xlane.xlu0 %984
        %986 = vmax.xlane.f32.xlu0 %v952
        %v987 = vpop.xlane.xlu0 %986
        %988 = vmax.xlane.f32.xlu0 %v953
        %v989 = vpop.xlane.xlu0 %988
        %990 = vmax.xlane.f32.xlu0 %v954
        %v991 = vpop.xlane.xlu0 %990
        %992 = vmax.xlane.f32.xlu0 %v955
        %v993 = vpop.xlane.xlu0 %992
        %994 = vmax.xlane.f32.xlu0 %v956
        %v995 = vpop.xlane.xlu0 %994
        %996 = vmax.xlane.f32.xlu0 %v957
        %v997 = vpop.xlane.xlu0 %996
        %998 = vmax.xlane.f32.xlu0 %v958
        %v999 = vpop.xlane.xlu0 %998
        %1000 = vmax.xlane.f32.xlu0 %v959
        %v1001 = vpop.xlane.xlu0 %1000
        %1002 = vmax.xlane.f32.xlu0 %v960
        %v1003 = vpop.xlane.xlu0 %1002
        %1004 = vmax.xlane.f32.xlu0 %v961
        %v1005 = vpop.xlane.xlu0 %1004
        %1006 = vmax.xlane.f32.xlu0 %v962
        %v1007 = vpop.xlane.xlu0 %1006
        %1008 = vmax.xlane.f32.xlu0 %v963
        %v1009 = vpop.xlane.xlu0 %1008
        %1010 = vmax.xlane.f32.xlu0 %v964
        %v1011 = vpop.xlane.xlu0 %1010
        %1012 = vmax.xlane.f32.xlu0 %v965
        %v1013 = vpop.xlane.xlu0 %1012
        %v1014 = vmax.f32 %v966, %v983
        %v1015 = vmax.f32 %v967, %v985
        %v1016 = vmax.f32 %v968, %v987
        %v1017 = vmax.f32 %v969, %v989
        %v1018 = vmax.f32 %v970, %v991
        %v1019 = vmax.f32 %v971, %v993
        %v1020 = vmax.f32 %v972, %v995
        %v1021 = vmax.f32 %v973, %v997
        %v1022 = vmax.f32 %v974, %v999
        %v1023 = vmax.f32 %v975, %v1001
        %v1024 = vmax.f32 %v976, %v1003
        %v1025 = vmax.f32 %v977, %v1005
        %v1026 = vmax.f32 %v978, %v1007
        %v1027 = vmax.f32 %v979, %v1009
        %v1028 = vmax.f32 %v980, %v1011
        %v1029 = vmax.f32 %v981, %v1013
        %v1030 = vsub.f32 %v966, %v1014
        %v1031 = vsub.f32 %v967, %v1015
        %v1032 = vsub.f32 %v968, %v1016
        %v1033 = vsub.f32 %v969, %v1017
        %v1034 = vsub.f32 %v970, %v1018
        %v1035 = vsub.f32 %v971, %v1019
        %v1036 = vsub.f32 %v972, %v1020
        %v1037 = vsub.f32 %v973, %v1021
        %v1038 = vsub.f32 %v974, %v1022
        %v1039 = vsub.f32 %v975, %v1023
        %v1040 = vsub.f32 %v976, %v1024
        %v1041 = vsub.f32 %v977, %v1025
        %v1042 = vsub.f32 %v978, %v1026
        %v1043 = vsub.f32 %v979, %v1027
        %v1044 = vsub.f32 %v980, %v1028
        %v1045 = vsub.f32 %v981, %v1029
        %v1046 = vmul.f32 %v1030, 1.442695
        %v1047 = vpow.pop %v1046
        %v1048 = vmul.f32 %v1031, 1.442695
        %v1049 = vpow.pop %v1048
        %v1050 = vmul.f32 %v1032, 1.442695
        %v1051 = vpow.pop %v1050
        %v1052 = vmul.f32 %v1033, 1.442695
        %v1053 = vpow.pop %v1052
        %v1054 = vmul.f32 %v1034, 1.442695
        %v1055 = vpow.pop %v1054
        %v1056 = vmul.f32 %v1035, 1.442695
        %v1057 = vpow.pop %v1056
        %v1058 = vmul.f32 %v1036, 1.442695
        %v1059 = vpow.pop %v1058
        %v1060 = vmul.f32 %v1037, 1.442695
        %v1061 = vpow.pop %v1060
        %v1062 = vmul.f32 %v1038, 1.442695
        %v1063 = vpow.pop %v1062
        %v1064 = vmul.f32 %v1039, 1.442695
        %v1065 = vpow.pop %v1064
        %v1066 = vmul.f32 %v1040, 1.442695
        %v1067 = vpow.pop %v1066
        %v1068 = vmul.f32 %v1041, 1.442695
        %v1069 = vpow.pop %v1068
        %v1070 = vmul.f32 %v1042, 1.442695
        %v1071 = vpow.pop %v1070
        %v1072 = vmul.f32 %v1043, 1.442695
        %v1073 = vpow.pop %v1072
        %v1074 = vmul.f32 %v1044, 1.442695
        %v1075 = vpow.pop %v1074
        %v1076 = vmul.f32 %v1045, 1.442695
        %v1077 = vpow.pop %v1076
        %1079 = vset.pattern.permute.xlu0 0
        %1080 = vperm.xlu0 %1079, %v1014
        %v1081 = vpop.permute.xlu0 %1080
        %1084 = vset.pattern.permute.xlu0 0
        %1085 = vperm.xlu0 %1084, %v1015
        %v1086 = vpop.permute.xlu0 %1085
        %1089 = vset.pattern.permute.xlu0 0
        %1090 = vperm.xlu0 %1089, %v1016
        %v1091 = vpop.permute.xlu0 %1090
        %1094 = vset.pattern.permute.xlu0 0
        %1095 = vperm.xlu0 %1094, %v1017
        %v1096 = vpop.permute.xlu0 %1095
        %1099 = vset.pattern.permute.xlu0 0
        %1100 = vperm.xlu0 %1099, %v1018
        %v1101 = vpop.permute.xlu0 %1100
        %1104 = vset.pattern.permute.xlu0 0
        %1105 = vperm.xlu0 %1104, %v1019
        %v1106 = vpop.permute.xlu0 %1105
        %1109 = vset.pattern.permute.xlu0 0
        %1110 = vperm.xlu0 %1109, %v1020
        %v1111 = vpop.permute.xlu0 %1110
        %1114 = vset.pattern.permute.xlu0 0
        %1115 = vperm.xlu0 %1114, %v1021
        %v1116 = vpop.permute.xlu0 %1115
        %1119 = vset.pattern.permute.xlu0 0
        %1120 = vperm.xlu0 %1119, %v1022
        %v1121 = vpop.permute.xlu0 %1120
        %1124 = vset.pattern.permute.xlu0 0
        %1125 = vperm.xlu0 %1124, %v1023
        %v1126 = vpop.permute.xlu0 %1125
        %1129 = vset.pattern.permute.xlu0 0
        %1130 = vperm.xlu0 %1129, %v1024
        %v1131 = vpop.permute.xlu0 %1130
        %1134 = vset.pattern.permute.xlu0 0
        %1135 = vperm.xlu0 %1134, %v1025
        %v1136 = vpop.permute.xlu0 %1135
        %1139 = vset.pattern.permute.xlu0 0
        %1140 = vperm.xlu0 %1139, %v1026
        %v1141 = vpop.permute.xlu0 %1140
        %1144 = vset.pattern.permute.xlu0 0
        %1145 = vperm.xlu0 %1144, %v1027
        %v1146 = vpop.permute.xlu0 %1145
        %1149 = vset.pattern.permute.xlu0 0
        %1150 = vperm.xlu0 %1149, %v1028
        %v1151 = vpop.permute.xlu0 %1150
        %1154 = vset.pattern.permute.xlu0 0
        %1155 = vperm.xlu0 %1154, %v1029
        %v1156 = vpop.permute.xlu0 %1155
        %v1158 = vsub.f32 %v950, %v1081
        %v1159 = vsub.f32 %v951, %v1086
        %v1160 = vsub.f32 %v952, %v1091
        %v1161 = vsub.f32 %v953, %v1096
        %v1162 = vsub.f32 %v954, %v1101
        %v1163 = vsub.f32 %v955, %v1106
        %v1164 = vsub.f32 %v956, %v1111
        %v1165 = vsub.f32 %v957, %v1116
        %v1166 = vsub.f32 %v958, %v1121
        %v1167 = vsub.f32 %v959, %v1126
        %v1168 = vsub.f32 %v960, %v1131
        %v1169 = vsub.f32 %v961, %v1136
        %v1170 = vsub.f32 %v962, %v1141
        %v1171 = vsub.f32 %v963, %v1146
        %v1172 = vsub.f32 %v964, %v1151
        %v1173 = vsub.f32 %v965, %v1156
        %v1174 = vmul.f32 %v1158, 1.442695
        %v1175 = vpow.pop %v1174
        %v1176 = vmul.f32 %v1159, 1.442695
        %v1177 = vpow.pop %v1176
        %v1178 = vmul.f32 %v1160, 1.442695
        %v1179 = vpow.pop %v1178
        %v1180 = vmul.f32 %v1161, 1.442695
        %v1181 = vpow.pop %v1180
        %v1182 = vmul.f32 %v1162, 1.442695
        %v1183 = vpow.pop %v1182
        %v1184 = vmul.f32 %v1163, 1.442695
        %v1185 = vpow.pop %v1184
        %v1186 = vmul.f32 %v1164, 1.442695
        %v1187 = vpow.pop %v1186
        %v1188 = vmul.f32 %v1165, 1.442695
        %v1189 = vpow.pop %v1188
        %v1190 = vmul.f32 %v1166, 1.442695
        %v1191 = vpow.pop %v1190
        %v1192 = vmul.f32 %v1167, 1.442695
        %v1193 = vpow.pop %v1192
        %v1194 = vmul.f32 %v1168, 1.442695
        %v1195 = vpow.pop %v1194
        %v1196 = vmul.f32 %v1169, 1.442695
        %v1197 = vpow.pop %v1196
        %v1198 = vmul.f32 %v1170, 1.442695
        %v1199 = vpow.pop %v1198
        %v1200 = vmul.f32 %v1171, 1.442695
        %v1201 = vpow.pop %v1200
        %v1202 = vmul.f32 %v1172, 1.442695
        %v1203 = vpow.pop %v1202
        %v1204 = vmul.f32 %v1173, 1.442695
        %v1205 = vpow.pop %v1204
        %v1206 = vld [vmem:[#allocation4] sm:$0xff]
        %v1207 = vld [vmem:[#allocation4 + $0x8] sm:$0xff]
        %v1208 = vld [vmem:[#allocation4 + $0x10] sm:$0xff]
        %v1209 = vld [vmem:[#allocation4 + $0x18] sm:$0xff]
        %v1210 = vld [vmem:[#allocation4 + $0x20] sm:$0xff]
        %v1211 = vld [vmem:[#allocation4 + $0x28] sm:$0xff]
        %v1212 = vld [vmem:[#allocation4 + $0x30] sm:$0xff]
        %v1213 = vld [vmem:[#allocation4 + $0x38] sm:$0xff]
        %v1214 = vld [vmem:[#allocation4 + $0x40] sm:$0xff]
        %v1215 = vld [vmem:[#allocation4 + $0x48] sm:$0xff]
        %v1216 = vld [vmem:[#allocation4 + $0x50] sm:$0xff]
        %v1217 = vld [vmem:[#allocation4 + $0x58] sm:$0xff]
        %v1218 = vld [vmem:[#allocation4 + $0x60] sm:$0xff]
        %v1219 = vld [vmem:[#allocation4 + $0x68] sm:$0xff]
        %v1220 = vld [vmem:[#allocation4 + $0x70] sm:$0xff]
        %v1221 = vld [vmem:[#allocation4 + $0x78] sm:$0xff]
        %v1222 = vmul.f32 %v1047, %v1206
        %v1223 = vmul.f32 %v1049, %v1207
        %v1224 = vmul.f32 %v1051, %v1208
        %v1225 = vmul.f32 %v1053, %v1209
        %v1226 = vmul.f32 %v1055, %v1210
        %v1227 = vmul.f32 %v1057, %v1211
        %v1228 = vmul.f32 %v1059, %v1212
        %v1229 = vmul.f32 %v1061, %v1213
        %v1230 = vmul.f32 %v1063, %v1214
        %v1231 = vmul.f32 %v1065, %v1215
        %v1232 = vmul.f32 %v1067, %v1216
        %v1233 = vmul.f32 %v1069, %v1217
        %v1234 = vmul.f32 %v1071, %v1218
        %v1235 = vmul.f32 %v1073, %v1219
        %v1236 = vmul.f32 %v1075, %v1220
        %v1237 = vmul.f32 %v1077, %v1221
        %1238 = vadd.xlane.f32.xlu0 %v1175
        %v1239 = vpop.xlane.xlu0 %1238
        %1240 = vadd.xlane.f32.xlu0 %v1177
        %v1241 = vpop.xlane.xlu0 %1240
        %1242 = vadd.xlane.f32.xlu0 %v1179
        %v1243 = vpop.xlane.xlu0 %1242
        %1244 = vadd.xlane.f32.xlu0 %v1181
        %v1245 = vpop.xlane.xlu0 %1244
        %1246 = vadd.xlane.f32.xlu0 %v1183
        %v1247 = vpop.xlane.xlu0 %1246
        %1248 = vadd.xlane.f32.xlu0 %v1185
        %v1249 = vpop.xlane.xlu0 %1248
        %1250 = vadd.xlane.f32.xlu0 %v1187
        %v1251 = vpop.xlane.xlu0 %1250
        %1252 = vadd.xlane.f32.xlu0 %v1189
        %v1253 = vpop.xlane.xlu0 %1252
        %1254 = vadd.xlane.f32.xlu0 %v1191
        %v1255 = vpop.xlane.xlu0 %1254
        %1256 = vadd.xlane.f32.xlu0 %v1193
        %v1257 = vpop.xlane.xlu0 %1256
        %1258 = vadd.xlane.f32.xlu0 %v1195
        %v1259 = vpop.xlane.xlu0 %1258
        %1260 = vadd.xlane.f32.xlu0 %v1197
        %v1261 = vpop.xlane.xlu0 %1260
        %1262 = vadd.xlane.f32.xlu0 %v1199
        %v1263 = vpop.xlane.xlu0 %1262
        %1264 = vadd.xlane.f32.xlu0 %v1201
        %v1265 = vpop.xlane.xlu0 %1264
        %1266 = vadd.xlane.f32.xlu0 %v1203
        %v1267 = vpop.xlane.xlu0 %1266
        %1268 = vadd.xlane.f32.xlu0 %v1205
        %v1269 = vpop.xlane.xlu0 %1268
        %v1270 = vadd.f32 %v1222, %v1239
        %v1271 = vadd.f32 %v1223, %v1241
        %v1272 = vadd.f32 %v1224, %v1243
        %v1273 = vadd.f32 %v1225, %v1245
        %v1274 = vadd.f32 %v1226, %v1247
        %v1275 = vadd.f32 %v1227, %v1249
        %v1276 = vadd.f32 %v1228, %v1251
        %v1277 = vadd.f32 %v1229, %v1253
        %v1278 = vadd.f32 %v1230, %v1255
        %v1279 = vadd.f32 %v1231, %v1257
        %v1280 = vadd.f32 %v1232, %v1259
        %v1281 = vadd.f32 %v1233, %v1261
        %v1282 = vadd.f32 %v1234, %v1263
        %v1283 = vadd.f32 %v1235, %v1265
        %v1284 = vadd.f32 %v1236, %v1267
        %v1285 = vadd.f32 %v1237, %v1269
        %vm1286 = vcmask 7168
        %1287 = vst.msk [vmem:[#allocation4] sm:$0xff] %vm1286, %v1270
        %1288 = vst.msk [vmem:[#allocation4 + $0x8] sm:$0xff] %vm1286, %v1271
        %1289 = vst.msk [vmem:[#allocation4 + $0x10] sm:$0xff] %vm1286, %v1272
        %1290 = vst.msk [vmem:[#allocation4 + $0x18] sm:$0xff] %vm1286, %v1273
        %1291 = vst.msk [vmem:[#allocation4 + $0x20] sm:$0xff] %vm1286, %v1274
        %1292 = vst.msk [vmem:[#allocation4 + $0x28] sm:$0xff] %vm1286, %v1275
        %1293 = vst.msk [vmem:[#allocation4 + $0x30] sm:$0xff] %vm1286, %v1276
        %1294 = vst.msk [vmem:[#allocation4 + $0x38] sm:$0xff] %vm1286, %v1277
        %1295 = vst.msk [vmem:[#allocation4 + $0x40] sm:$0xff] %vm1286, %v1278
        %1296 = vst.msk [vmem:[#allocation4 + $0x48] sm:$0xff] %vm1286, %v1279
        %1297 = vst.msk [vmem:[#allocation4 + $0x50] sm:$0xff] %vm1286, %v1280
        %1298 = vst.msk [vmem:[#allocation4 + $0x58] sm:$0xff] %vm1286, %v1281
        %1299 = vst.msk [vmem:[#allocation4 + $0x60] sm:$0xff] %vm1286, %v1282
        %1300 = vst.msk [vmem:[#allocation4 + $0x68] sm:$0xff] %vm1286, %v1283
        %1301 = vst.msk [vmem:[#allocation4 + $0x70] sm:$0xff] %vm1286, %v1284
        %1302 = vst.msk [vmem:[#allocation4 + $0x78] sm:$0xff] %vm1286, %v1285
        %v1303 = vld [vmem:[#allocation5] sm:$0xff]
        %v1304 = vld [vmem:[#allocation5 + $0x8] sm:$0xff]
        %v1305 = vld [vmem:[#allocation5 + $0x10] sm:$0xff]
        %v1306 = vld [vmem:[#allocation5 + $0x18] sm:$0xff]
        %v1307 = vld [vmem:[#allocation5 + $0x20] sm:$0xff]
        %v1308 = vld [vmem:[#allocation5 + $0x28] sm:$0xff]
        %v1309 = vld [vmem:[#allocation5 + $0x30] sm:$0xff]
        %v1310 = vld [vmem:[#allocation5 + $0x38] sm:$0xff]
        %v1311 = vld [vmem:[#allocation5 + $0x40] sm:$0xff]
        %v1312 = vld [vmem:[#allocation5 + $0x48] sm:$0xff]
        %v1313 = vld [vmem:[#allocation5 + $0x50] sm:$0xff]
        %v1314 = vld [vmem:[#allocation5 + $0x58] sm:$0xff]
        %v1315 = vld [vmem:[#allocation5 + $0x60] sm:$0xff]
        %v1316 = vld [vmem:[#allocation5 + $0x68] sm:$0xff]
        %v1317 = vld [vmem:[#allocation5 + $0x70] sm:$0xff]
        %v1318 = vld [vmem:[#allocation5 + $0x78] sm:$0xff]
        %1320 = vset.pattern.permute.xlu0 0
        %1321 = vperm.xlu0 %1320, %v1047
        %v1322 = vpop.permute.xlu0 %1321
        %1325 = vset.pattern.permute.xlu0 0
        %1326 = vperm.xlu0 %1325, %v1049
        %v1327 = vpop.permute.xlu0 %1326
        %1330 = vset.pattern.permute.xlu0 0
        %1331 = vperm.xlu0 %1330, %v1051
        %v1332 = vpop.permute.xlu0 %1331
        %1335 = vset.pattern.permute.xlu0 0
        %1336 = vperm.xlu0 %1335, %v1053
        %v1337 = vpop.permute.xlu0 %1336
        %1340 = vset.pattern.permute.xlu0 0
        %1341 = vperm.xlu0 %1340, %v1055
        %v1342 = vpop.permute.xlu0 %1341
        %1345 = vset.pattern.permute.xlu0 0
        %1346 = vperm.xlu0 %1345, %v1057
        %v1347 = vpop.permute.xlu0 %1346
        %1350 = vset.pattern.permute.xlu0 0
        %1351 = vperm.xlu0 %1350, %v1059
        %v1352 = vpop.permute.xlu0 %1351
        %1355 = vset.pattern.permute.xlu0 0
        %1356 = vperm.xlu0 %1355, %v1061
        %v1357 = vpop.permute.xlu0 %1356
        %1360 = vset.pattern.permute.xlu0 0
        %1361 = vperm.xlu0 %1360, %v1063
        %v1362 = vpop.permute.xlu0 %1361
        %1365 = vset.pattern.permute.xlu0 0
        %1366 = vperm.xlu0 %1365, %v1065
        %v1367 = vpop.permute.xlu0 %1366
        %1370 = vset.pattern.permute.xlu0 0
        %1371 = vperm.xlu0 %1370, %v1067
        %v1372 = vpop.permute.xlu0 %1371
        %1375 = vset.pattern.permute.xlu0 0
        %1376 = vperm.xlu0 %1375, %v1069
        %v1377 = vpop.permute.xlu0 %1376
        %1380 = vset.pattern.permute.xlu0 0
        %1381 = vperm.xlu0 %1380, %v1071
        %v1382 = vpop.permute.xlu0 %1381
        %1385 = vset.pattern.permute.xlu0 0
        %1386 = vperm.xlu0 %1385, %v1073
        %v1387 = vpop.permute.xlu0 %1386
        %1390 = vset.pattern.permute.xlu0 0
        %1391 = vperm.xlu0 %1390, %v1075
        %v1392 = vpop.permute.xlu0 %1391
        %1395 = vset.pattern.permute.xlu0 0
        %1396 = vperm.xlu0 %1395, %v1077
        %v1397 = vpop.permute.xlu0 %1396
        %v1399 = vmul.f32 %v1322, %v1303
        %v1400 = vmul.f32 %v1327, %v1304
        %v1401 = vmul.f32 %v1332, %v1305
        %v1402 = vmul.f32 %v1337, %v1306
        %v1403 = vmul.f32 %v1342, %v1307
        %v1404 = vmul.f32 %v1347, %v1308
        %v1405 = vmul.f32 %v1352, %v1309
        %v1406 = vmul.f32 %v1357, %v1310
        %v1407 = vmul.f32 %v1362, %v1311
        %v1408 = vmul.f32 %v1367, %v1312
        %v1409 = vmul.f32 %v1372, %v1313
        %v1410 = vmul.f32 %v1377, %v1314
        %v1411 = vmul.f32 %v1382, %v1315
        %v1412 = vmul.f32 %v1387, %v1316
        %v1413 = vmul.f32 %v1392, %v1317
        %v1414 = vmul.f32 %v1397, %v1318
        %v1415 = vpack.c.bf16 %v1177, %v1175
        %v1416 = vpack.c.bf16 %v1181, %v1179
        %v1417 = vpack.c.bf16 %v1185, %v1183
        %v1418 = vpack.c.bf16 %v1189, %v1187
        %v1419 = vpack.c.bf16 %v1193, %v1191
        %v1420 = vpack.c.bf16 %v1197, %v1195
        %v1421 = vpack.c.bf16 %v1201, %v1199
        %v1422 = vpack.c.bf16 %v1205, %v1203
        %v1423 = vld [vmem:[%s379] sm:$0xf]
        %v1424 = vld [vmem:[%s379 + $0x4] sm:$0xf]
        %v1425 = vld [vmem:[%s379 + $0x8] sm:$0xf]
        %v1426 = vld [vmem:[%s379 + $0xc] sm:$0xf]
        %v1427 = vld [vmem:[%s379 + $0x10] sm:$0xf]
        %v1428 = vld [vmem:[%s379 + $0x14] sm:$0xf]
        %v1429 = vld [vmem:[%s379 + $0x18] sm:$0xf]
        %v1430 = vld [vmem:[%s379 + $0x1c] sm:$0xf]
        %v1431 = vld [vmem:[%s379 + $0x20] sm:$0xf]
        %v1432 = vld [vmem:[%s379 + $0x24] sm:$0xf]
        %v1433 = vld [vmem:[%s379 + $0x28] sm:$0xf]
        %v1434 = vld [vmem:[%s379 + $0x2c] sm:$0xf]
        %v1435 = vld [vmem:[%s379 + $0x30] sm:$0xf]
        %v1436 = vld [vmem:[%s379 + $0x34] sm:$0xf]
        %v1437 = vld [vmem:[%s379 + $0x38] sm:$0xf]
        %v1438 = vld [vmem:[%s379 + $0x3c] sm:$0xf]
        %v1455 = vunpack.c.l.b16 %v1423
        %v1456 = vunpack.c.l.b16 %v1424
        %v1457 = vunpack.c.l.b16 %v1425
        %v1458 = vunpack.c.l.b16 %v1426
        %v1459 = vunpack.c.l.b16 %v1427
        %v1460 = vunpack.c.l.b16 %v1428
        %v1461 = vunpack.c.l.b16 %v1429
        %v1462 = vunpack.c.l.b16 %v1430
        %v1463 = vunpack.c.l.b16 %v1431
        %v1464 = vunpack.c.l.b16 %v1432
        %v1465 = vunpack.c.l.b16 %v1433
        %v1466 = vunpack.c.l.b16 %v1434
        %v1467 = vunpack.c.l.b16 %v1435
        %v1468 = vunpack.c.l.b16 %v1436
        %v1469 = vunpack.c.l.b16 %v1437
        %v1470 = vunpack.c.l.b16 %v1438
        %v1471 = vpack.c.b16 %v1456, %v1455
        %v1472 = vpack.c.b16 %v1458, %v1457
        %v1473 = vpack.c.b16 %v1460, %v1459
        %v1474 = vpack.c.b16 %v1462, %v1461
        %v1475 = vpack.c.b16 %v1464, %v1463
        %v1476 = vpack.c.b16 %v1466, %v1465
        %v1477 = vpack.c.b16 %v1468, %v1467
        %v1478 = vpack.c.b16 %v1470, %v1469
        %1487 = vmatprep.subr.bf16.mxu0 0
        %1488 = vmatpush1.bf16.msra.mxu0 %v1478
        %1489 = vmatprep.subr.bf16.mxu0 0
        %1490 = vmatpush1.bf16.msra.mxu0 %v1477
        %1491 = vmatprep.subr.bf16.mxu0 0
        %1492 = vmatpush1.bf16.msra.mxu0 %v1476
        %1493 = vmatprep.subr.bf16.mxu0 0
        %1494 = vmatpush1.bf16.msra.mxu0 %v1475
        %1495 = vmatprep.subr.bf16.mxu0 0
        %1496 = vmatpush1.bf16.msra.mxu0 %v1474
        %1497 = vmatprep.subr.bf16.mxu0 0
        %1498 = vmatpush1.bf16.msra.mxu0 %v1473
        %1499 = vmatprep.subr.bf16.mxu0 0
        %1500 = vmatpush1.bf16.msra.mxu0 %v1472
        %1501 = vmatprep.subr.bf16.mxu0 0
        %1502 = vmatpush1.bf16.msra.mxu0 %v1471
        %1503 = vmatprep.subr.bf16.mxu0 0
        %1504 = vmatpush2.bf16.msra.mxu0 0
        %1505 = vmatprep.subr.bf16.mxu0 0
        %1506 = vmatpush2.bf16.msra.mxu0 0
        %1507 = vmatprep.subr.bf16.mxu0 0
        %1508 = vmatpush2.bf16.msra.mxu0 0
        %1509 = vmatprep.subr.bf16.mxu0 0
        %1510 = vmatpush2.bf16.msra.mxu0 0
        %1511 = vmatprep.subr.bf16.mxu0 0
        %1512 = vmatpush2.bf16.msra.mxu0 0
        %1513 = vmatprep.subr.bf16.mxu0 0
        %1514 = vmatpush2.bf16.msra.mxu0 0
        %1515 = vmatprep.subr.bf16.mxu0 0
        %1516 = vmatpush2.bf16.msra.mxu0 0
        %1517 = vmatprep.subr.bf16.mxu0 0
        %1518 = vmatpush2.bf16.msra.mxu0 0
        %1519 = vmatprep.mubr.bf16.mxu0 0
        %1520 = vmatmul.mubr.bf16.gmra.mxu0 %v1415
        %v1521 = vpop.f32.mrf.mxu0
        %v1522 = vadd.f32 0.0, %v1521
        %v1523 = vpop.f32.mrf.mxu0
        %v1524 = vpop.f32.mrf.mxu0
        %v1525 = vadd.f32 0.0, %v1524
        %v1526 = vpop.f32.mrf.mxu0
        %1527 = vmatprep.mubr.bf16.mxu0 0
        %1528 = vmatmul.mubr.bf16.gmra.mxu0 %v1416
        %v1529 = vpop.f32.mrf.mxu0
        %v1530 = vadd.f32 0.0, %v1529
        %v1531 = vpop.f32.mrf.mxu0
        %v1532 = vpop.f32.mrf.mxu0
        %v1533 = vadd.f32 0.0, %v1532
        %v1534 = vpop.f32.mrf.mxu0
        %1535 = vmatprep.mubr.bf16.mxu0 0
        %1536 = vmatmul.mubr.bf16.gmra.mxu0 %v1417
        %v1537 = vpop.f32.mrf.mxu0
        %v1538 = vadd.f32 0.0, %v1537
        %v1539 = vpop.f32.mrf.mxu0
        %v1540 = vpop.f32.mrf.mxu0
        %v1541 = vadd.f32 0.0, %v1540
        %v1542 = vpop.f32.mrf.mxu0
        %1543 = vmatprep.mubr.bf16.mxu0 0
        %1544 = vmatmul.mubr.bf16.gmra.mxu0 %v1418
        %v1545 = vpop.f32.mrf.mxu0
        %v1546 = vadd.f32 0.0, %v1545
        %v1547 = vpop.f32.mrf.mxu0
        %v1548 = vpop.f32.mrf.mxu0
        %v1549 = vadd.f32 0.0, %v1548
        %v1550 = vpop.f32.mrf.mxu0
        %1551 = vmatprep.mubr.bf16.mxu0 0
        %1552 = vmatmul.mubr.bf16.gmra.mxu0 %v1419
        %v1553 = vpop.f32.mrf.mxu0
        %v1554 = vadd.f32 0.0, %v1553
        %v1555 = vpop.f32.mrf.mxu0
        %v1556 = vpop.f32.mrf.mxu0
        %v1557 = vadd.f32 0.0, %v1556
        %v1558 = vpop.f32.mrf.mxu0
        %1559 = vmatprep.mubr.bf16.mxu0 0
        %1560 = vmatmul.mubr.bf16.gmra.mxu0 %v1420
        %v1561 = vpop.f32.mrf.mxu0
        %v1562 = vadd.f32 0.0, %v1561
        %v1563 = vpop.f32.mrf.mxu0
        %v1564 = vpop.f32.mrf.mxu0
        %v1565 = vadd.f32 0.0, %v1564
        %v1566 = vpop.f32.mrf.mxu0
        %1567 = vmatprep.mubr.bf16.mxu0 0
        %1568 = vmatmul.mubr.bf16.gmra.mxu0 %v1421
        %v1569 = vpop.f32.mrf.mxu0
        %v1570 = vadd.f32 0.0, %v1569
        %v1571 = vpop.f32.mrf.mxu0
        %v1572 = vpop.f32.mrf.mxu0
        %v1573 = vadd.f32 0.0, %v1572
        %v1574 = vpop.f32.mrf.mxu0
        %1575 = vmatprep.mubr.bf16.mxu0 0
        %1576 = vmatmul.mubr.bf16.gmra.mxu0 %v1422
        %v1577 = vpop.f32.mrf.mxu0
        %v1578 = vadd.f32 0.0, %v1577
        %v1579 = vpop.f32.mrf.mxu0
        %v1580 = vpop.f32.mrf.mxu0
        %v1581 = vadd.f32 0.0, %v1580
        %v1582 = vpop.f32.mrf.mxu0
        %1583 = vdwg.mxu0
        %v1584 = vadd.f32 %v1399, %v1522
        %v1585 = vadd.f32 %v1400, %v1525
        %v1586 = vadd.f32 %v1401, %v1530
        %v1587 = vadd.f32 %v1402, %v1533
        %v1588 = vadd.f32 %v1403, %v1538
        %v1589 = vadd.f32 %v1404, %v1541
        %v1590 = vadd.f32 %v1405, %v1546
        %v1591 = vadd.f32 %v1406, %v1549
        %v1592 = vadd.f32 %v1407, %v1554
        %v1593 = vadd.f32 %v1408, %v1557
        %v1594 = vadd.f32 %v1409, %v1562
        %v1595 = vadd.f32 %v1410, %v1565
        %v1596 = vadd.f32 %v1411, %v1570
        %v1597 = vadd.f32 %v1412, %v1573
        %v1598 = vadd.f32 %v1413, %v1578
        %v1599 = vadd.f32 %v1414, %v1581
        %1600 = vst [vmem:[#allocation5] sm:$0xff] %v1584
        %1601 = vst [vmem:[#allocation5 + $0x8] sm:$0xff] %v1585
        %1602 = vst [vmem:[#allocation5 + $0x10] sm:$0xff] %v1586
        %1603 = vst [vmem:[#allocation5 + $0x18] sm:$0xff] %v1587
        %1604 = vst [vmem:[#allocation5 + $0x20] sm:$0xff] %v1588
        %1605 = vst [vmem:[#allocation5 + $0x28] sm:$0xff] %v1589
        %1606 = vst [vmem:[#allocation5 + $0x30] sm:$0xff] %v1590
        %1607 = vst [vmem:[#allocation5 + $0x38] sm:$0xff] %v1591
        %1608 = vst [vmem:[#allocation5 + $0x40] sm:$0xff] %v1592
        %1609 = vst [vmem:[#allocation5 + $0x48] sm:$0xff] %v1593
        %1610 = vst [vmem:[#allocation5 + $0x50] sm:$0xff] %v1594
        %1611 = vst [vmem:[#allocation5 + $0x58] sm:$0xff] %v1595
        %1612 = vst [vmem:[#allocation5 + $0x60] sm:$0xff] %v1596
        %1613 = vst [vmem:[#allocation5 + $0x68] sm:$0xff] %v1597
        %1614 = vst [vmem:[#allocation5 + $0x70] sm:$0xff] %v1598
        %1615 = vst [vmem:[#allocation5 + $0x78] sm:$0xff] %v1599
        %1616 = vst.msk [vmem:[#allocation3] sm:$0xff] %vm1286, %v1014
        %1617 = vst.msk [vmem:[#allocation3 + $0x8] sm:$0xff] %vm1286, %v1015
        %1618 = vst.msk [vmem:[#allocation3 + $0x10] sm:$0xff] %vm1286, %v1016
        %1619 = vst.msk [vmem:[#allocation3 + $0x18] sm:$0xff] %vm1286, %v1017
        %1620 = vst.msk [vmem:[#allocation3 + $0x20] sm:$0xff] %vm1286, %v1018
        %1621 = vst.msk [vmem:[#allocation3 + $0x28] sm:$0xff] %vm1286, %v1019
        %1622 = vst.msk [vmem:[#allocation3 + $0x30] sm:$0xff] %vm1286, %v1020
        %1623 = vst.msk [vmem:[#allocation3 + $0x38] sm:$0xff] %vm1286, %v1021
        %1624 = vst.msk [vmem:[#allocation3 + $0x40] sm:$0xff] %vm1286, %v1022
        %1625 = vst.msk [vmem:[#allocation3 + $0x48] sm:$0xff] %vm1286, %v1023
        %1626 = vst.msk [vmem:[#allocation3 + $0x50] sm:$0xff] %vm1286, %v1024
        %1627 = vst.msk [vmem:[#allocation3 + $0x58] sm:$0xff] %vm1286, %v1025
        %1628 = vst.msk [vmem:[#allocation3 + $0x60] sm:$0xff] %vm1286, %v1026
        %1629 = vst.msk [vmem:[#allocation3 + $0x68] sm:$0xff] %vm1286, %v1027
        %1630 = vst.msk [vmem:[#allocation3 + $0x70] sm:$0xff] %vm1286, %v1028
        %1631 = vst.msk [vmem:[#allocation3 + $0x78] sm:$0xff] %vm1286, %v1029
        %p1632 = scmp.eq.s32.totalorder %s25, 2
        // Predicated region
        $region79: #{tpu_custom_call.1} parent=69 // pred_check
          %p1633 = pneg %p1632
        $region80: #{tpu_custom_call.1} parent=69 // pred_check_branch
          %1635 = sbr.rel (%p1633) target = $region82
        $region81: #{tpu_custom_call.1} parent=69 // pred_region
          %v1636 = vld [vmem:[#allocation4] sm:$0xff]
          %v1637 = vld [vmem:[#allocation4 + $0x8] sm:$0xff]
          %v1638 = vld [vmem:[#allocation4 + $0x10] sm:$0xff]
          %v1639 = vld [vmem:[#allocation4 + $0x18] sm:$0xff]
          %v1640 = vld [vmem:[#allocation4 + $0x20] sm:$0xff]
          %v1641 = vld [vmem:[#allocation4 + $0x28] sm:$0xff]
          %v1642 = vld [vmem:[#allocation4 + $0x30] sm:$0xff]
          %v1643 = vld [vmem:[#allocation4 + $0x38] sm:$0xff]
          %v1644 = vld [vmem:[#allocation4 + $0x40] sm:$0xff]
          %v1645 = vld [vmem:[#allocation4 + $0x48] sm:$0xff]
          %v1646 = vld [vmem:[#allocation4 + $0x50] sm:$0xff]
          %v1647 = vld [vmem:[#allocation4 + $0x58] sm:$0xff]
          %v1648 = vld [vmem:[#allocation4 + $0x60] sm:$0xff]
          %v1649 = vld [vmem:[#allocation4 + $0x68] sm:$0xff]
          %v1650 = vld [vmem:[#allocation4 + $0x70] sm:$0xff]
          %v1651 = vld [vmem:[#allocation4 + $0x78] sm:$0xff]
          %v1652 = vrcp.pop %v1636
          %v1653 = vrcp.pop %v1637
          %v1654 = vrcp.pop %v1638
          %v1655 = vrcp.pop %v1639
          %v1656 = vrcp.pop %v1640
          %v1657 = vrcp.pop %v1641
          %v1658 = vrcp.pop %v1642
          %v1659 = vrcp.pop %v1643
          %v1660 = vrcp.pop %v1644
          %v1661 = vrcp.pop %v1645
          %v1662 = vrcp.pop %v1646
          %v1663 = vrcp.pop %v1647
          %v1664 = vrcp.pop %v1648
          %v1665 = vrcp.pop %v1649
          %v1666 = vrcp.pop %v1650
          %v1667 = vrcp.pop %v1651
          %v1668 = vld [vmem:[#allocation5] sm:$0xff]
          %v1669 = vld [vmem:[#allocation5 + $0x8] sm:$0xff]
          %v1670 = vld [vmem:[#allocation5 + $0x10] sm:$0xff]
          %v1671 = vld [vmem:[#allocation5 + $0x18] sm:$0xff]
          %v1672 = vld [vmem:[#allocation5 + $0x20] sm:$0xff]
          %v1673 = vld [vmem:[#allocation5 + $0x28] sm:$0xff]
          %v1674 = vld [vmem:[#allocation5 + $0x30] sm:$0xff]
          %v1675 = vld [vmem:[#allocation5 + $0x38] sm:$0xff]
          %v1676 = vld [vmem:[#allocation5 + $0x40] sm:$0xff]
          %v1677 = vld [vmem:[#allocation5 + $0x48] sm:$0xff]
          %v1678 = vld [vmem:[#allocation5 + $0x50] sm:$0xff]
          %v1679 = vld [vmem:[#allocation5 + $0x58] sm:$0xff]
          %v1680 = vld [vmem:[#allocation5 + $0x60] sm:$0xff]
          %v1681 = vld [vmem:[#allocation5 + $0x68] sm:$0xff]
          %v1682 = vld [vmem:[#allocation5 + $0x70] sm:$0xff]
          %v1683 = vld [vmem:[#allocation5 + $0x78] sm:$0xff]
          %1685 = vset.pattern.permute.xlu0 0
          %1686 = vperm.xlu0 %1685, %v1652
          %v1687 = vpop.permute.xlu0 %1686
          %1690 = vset.pattern.permute.xlu0 0
          %1691 = vperm.xlu0 %1690, %v1653
          %v1692 = vpop.permute.xlu0 %1691
          %1695 = vset.pattern.permute.xlu0 0
          %1696 = vperm.xlu0 %1695, %v1654
          %v1697 = vpop.permute.xlu0 %1696
          %1700 = vset.pattern.permute.xlu0 0
          %1701 = vperm.xlu0 %1700, %v1655
          %v1702 = vpop.permute.xlu0 %1701
          %1705 = vset.pattern.permute.xlu0 0
          %1706 = vperm.xlu0 %1705, %v1656
          %v1707 = vpop.permute.xlu0 %1706
          %1710 = vset.pattern.permute.xlu0 0
          %1711 = vperm.xlu0 %1710, %v1657
          %v1712 = vpop.permute.xlu0 %1711
          %1715 = vset.pattern.permute.xlu0 0
          %1716 = vperm.xlu0 %1715, %v1658
          %v1717 = vpop.permute.xlu0 %1716
          %1720 = vset.pattern.permute.xlu0 0
          %1721 = vperm.xlu0 %1720, %v1659
          %v1722 = vpop.permute.xlu0 %1721
          %1725 = vset.pattern.permute.xlu0 0
          %1726 = vperm.xlu0 %1725, %v1660
          %v1727 = vpop.permute.xlu0 %1726
          %1730 = vset.pattern.permute.xlu0 0
          %1731 = vperm.xlu0 %1730, %v1661
          %v1732 = vpop.permute.xlu0 %1731
          %1735 = vset.pattern.permute.xlu0 0
          %1736 = vperm.xlu0 %1735, %v1662
          %v1737 = vpop.permute.xlu0 %1736
          %1740 = vset.pattern.permute.xlu0 0
          %1741 = vperm.xlu0 %1740, %v1663
          %v1742 = vpop.permute.xlu0 %1741
          %1745 = vset.pattern.permute.xlu0 0
          %1746 = vperm.xlu0 %1745, %v1664
          %v1747 = vpop.permute.xlu0 %1746
          %1750 = vset.pattern.permute.xlu0 0
          %1751 = vperm.xlu0 %1750, %v1665
          %v1752 = vpop.permute.xlu0 %1751
          %1755 = vset.pattern.permute.xlu0 0
          %1756 = vperm.xlu0 %1755, %v1666
          %v1757 = vpop.permute.xlu0 %1756
          %1760 = vset.pattern.permute.xlu0 0
          %1761 = vperm.xlu0 %1760, %v1667
          %v1762 = vpop.permute.xlu0 %1761
          %v1764 = vmul.f32 %v1668, %v1687
          %v1765 = vmul.f32 %v1669, %v1692
          %v1766 = vmul.f32 %v1670, %v1697
          %v1767 = vmul.f32 %v1671, %v1702
          %v1768 = vmul.f32 %v1672, %v1707
          %v1769 = vmul.f32 %v1673, %v1712
          %v1770 = vmul.f32 %v1674, %v1717
          %v1771 = vmul.f32 %v1675, %v1722
          %v1772 = vmul.f32 %v1676, %v1727
          %v1773 = vmul.f32 %v1677, %v1732
          %v1774 = vmul.f32 %v1678, %v1737
          %v1775 = vmul.f32 %v1679, %v1742
          %v1776 = vmul.f32 %v1680, %v1747
          %v1777 = vmul.f32 %v1681, %v1752
          %v1778 = vmul.f32 %v1682, %v1757
          %v1779 = vmul.f32 %v1683, %v1762
          %1780 = vst [vmem:[%s350] sm:$0xff] %v1764
          %1781 = vst [vmem:[%s350 + $0x8] sm:$0xff] %v1765
          %1782 = vst [vmem:[%s350 + $0x10] sm:$0xff] %v1766
          %1783 = vst [vmem:[%s350 + $0x18] sm:$0xff] %v1767
          %1784 = vst [vmem:[%s350 + $0x20] sm:$0xff] %v1768
          %1785 = vst [vmem:[%s350 + $0x28] sm:$0xff] %v1769
          %1786 = vst [vmem:[%s350 + $0x30] sm:$0xff] %v1770
          %1787 = vst [vmem:[%s350 + $0x38] sm:$0xff] %v1771
          %1788 = vst [vmem:[%s350 + $0x40] sm:$0xff] %v1772
          %1789 = vst [vmem:[%s350 + $0x48] sm:$0xff] %v1773
          %1790 = vst [vmem:[%s350 + $0x50] sm:$0xff] %v1774
          %1791 = vst [vmem:[%s350 + $0x58] sm:$0xff] %v1775
          %1792 = vst [vmem:[%s350 + $0x60] sm:$0xff] %v1776
          %1793 = vst [vmem:[%s350 + $0x68] sm:$0xff] %v1777
          %1794 = vst [vmem:[%s350 + $0x70] sm:$0xff] %v1778
          %1795 = vst [vmem:[%s350 + $0x78] sm:$0xff] %v1779
        $region82: #{tpu_custom_call.1} parent=69 // pred_fallthru
          _
        %s1796 = sand.u32 %s161, 1
        %s1797 = scalar_lea.sflag [#allocation8], %s1796
        %s1798 = sand.u32 %s161, 1
        %s1799 = smul.addr %s1798, 128
        %s1800 = scalar_lea.vmem [#allocation7], %s1799
        // Predicated region
        $region83: #{tpu_custom_call.1} parent=69 // pred_check
          %p1801 = pneg %p171
        $region84: #{tpu_custom_call.1} parent=69 // pred_check_branch
          %1803 = sbr.rel (%p1801) target = $region86
        $region85: #{tpu_custom_call.1} parent=69 // pred_region
          %s1804 = smul.u32 16, %s24
          %s1806 = ssub.s32 2048, 2048
          %1807 = vsyncadd %s1797, %s1806
          %s1808 = smul.addr %s23, 32
          %s1809 = sadd.s32 %s1804, %s1808
          %s1810 = smul.addr %s1809, 128
          %s1811 = scalar_lea.hbm %s4, %s1810
          %s1812 = sshll.u32 %s1800, 4
          %s1813 = int_to_ptr.vmem [resolvable:$true] %s1812
          %1818 = dma.vmem_to_hbm [thread:$0]  %s1813, 2048, %s1811, %s1797, 128, 128, 8
        $region86: #{tpu_custom_call.1} parent=69 // pred_fallthru
          _
      $region70: #{tpu_custom_call.1} parent=5 // pred_fallthru
        _
      %p1819 = scmp.le.s32.totalorder 2, %s13
      // Predicated region
      $region87: #{tpu_custom_call.1} parent=5 // pred_check
        %p1820 = pneg %p1819
      $region88: #{tpu_custom_call.1} parent=5 // pred_check_branch
        %1822 = sbr.rel (%p1820) target = $region90
      $region89: #{tpu_custom_call.1} parent=5 // pred_region
        %s1823 = ssub.s32 %s13, 2
        // Predicated region
        $region91: #{tpu_custom_call.1} parent=89 // pred_check
          %p1824 = pneg %p177
        $region92: #{tpu_custom_call.1} parent=89 // pred_check_branch
          %1826 = sbr.rel (%p1824) target = $region94
        $region93: #{tpu_custom_call.1} parent=89 // pred_region
          %s1827 = sand.u32 %s162, 1
          %s1828 = scalar_lea.sflag [#allocation8], %s1827
          %s1829 = sand.u32 %s162, 1
          %s1830 = smul.addr %s1829, 128
          %s1831 = scalar_lea.vmem [#allocation7], %s1830
          %1832 = dma.done %s1828, 2048
        $region94: #{tpu_custom_call.1} parent=89 // pred_fallthru
          _
      $region90: #{tpu_custom_call.1} parent=5 // pred_fallthru
        _
    $region6: #{tpu_custom_call.1} parent=1 // loop_footer
      %s17 = sadd.s32 1, %s13
    $region7: #{tpu_custom_call.1} parent=1 // loop_footer_branch
      %12 = sbr.rel target = $region3
    $region8: #{tpu_custom_call.1} parent=1 // loop_exit
      _
    %1833 = vsyncpa [#allocation8], 1
    %s1834 = scalar_lea.sflag [#allocation8], 1
    %1835 = vsyncpa %s1834, 1

</llo_original>
